<compile_context>
chip_gen: v6e
topology: v6e:2x2x1
jax: 0.10.0
libtpu: 0.0.40
codegen_flags: <defaults>
</compile_context>

<pallas_src>
import jax
import jax.numpy as jnp
from jax.experimental import pallas as pl
from jax.experimental.pallas import tpu as pltpu


def _basic_layer_kernel(x_ref, w_ref, scale_ref, shift_ref, out_ref, pad_ref):
    # x_ref    : (1, H*W, C)    input (also used as the residual), flattened spatial
    # w_ref    : (9*C, C)       3x3 conv weights, tap-major (dy, dx, Cin) x Cout
    # scale_ref: (1, C)         folded BN scale = gamma / sqrt(var + eps)
    # shift_ref: (1, C)         folded BN shift = beta - mean * scale
    # out_ref  : (1, H*W, C)
    # pad_ref  : (H+2, W+2, C)  VMEM scratch holding the zero-padded tile
    H = pad_ref.shape[0] - 2
    W = pad_ref.shape[1] - 2
    C = pad_ref.shape[2]

    x = x_ref[0]                                       # (H*W, C), read once

    # Build the zero-padded tile in VMEM (no padded HBM copy, no extra HBM read).
    # Re-zeroing the whole 41KB scratch every step is a handful of vector stores
    # and keeps the kernel correct under megacore grid splitting.
    pad_ref[...] = jnp.zeros_like(pad_ref)
    pad_ref[1:H + 1, 1:W + 1, :] = x.reshape(H, W, C)
    xpad = pad_ref[...]                                # (H+2, W+2, C)

    # Single im2col slab (one layout pass), then ONE fused K=9*C MXU matmul.
    cols = [
        xpad[dy:dy + H, dx:dx + W, :].reshape(H * W, C)
        for dy in range(3) for dx in range(3)
    ]
    lhs = jnp.concatenate(cols, axis=1)                # (H*W, 9*C)
    acc = jnp.dot(lhs, w_ref[...], preferred_element_type=jnp.float32)  # (H*W, C)

    # Folded BatchNorm (affine) + ReLU + residual, all in the acc layout.
    y = acc * scale_ref[...] + shift_ref[...]
    y = jnp.maximum(y, 0.0) + x
    out_ref[...] = y[None].astype(out_ref.dtype)


def basic_layer_forward(x_nhwc, w_mat, scale, shift):
    """x_nhwc: (N, H, W, C) f32; w_mat: (9*C, C); scale/shift: (1, C)."""
    N, H, W, C = x_nhwc.shape
    x_flat = x_nhwc.reshape(N, H * W, C)               # metadata-only reshape

    flops = 2 * N * H * W * 9 * C * C
    bytes_accessed = 2 * N * H * W * C * 4 + 9 * C * C * 4 + 2 * C * 4

    grid_spec = pltpu.PrefetchScalarGridSpec(
        num_scalar_prefetch=0,
        grid=(N,),
        in_specs=[
            pl.BlockSpec((1, H * W, C), lambda n: (n, 0, 0)),   # x (conv in + residual)
            pl.BlockSpec((9 * C, C), lambda n: (0, 0)),         # fused weights
            pl.BlockSpec((1, C), lambda n: (0, 0)),             # BN scale
            pl.BlockSpec((1, C), lambda n: (0, 0)),             # BN shift
        ],
        out_specs=pl.BlockSpec((1, H * W, C), lambda n: (n, 0, 0)),
        scratch_shapes=[pltpu.VMEM((H + 2, W + 2, C), jnp.float32)],
    )

    out = pl.pallas_call(
        _basic_layer_kernel,
        out_shape=jax.ShapeDtypeStruct((N, H * W, C), x_nhwc.dtype),
        grid_spec=grid_spec,
        compiler_params=pltpu.CompilerParams(
            dimension_semantics=("parallel",)),
        cost_estimate=pl.CostEstimate(
            flops=flops, transcendentals=0, bytes_accessed=bytes_accessed),
    )(x_flat, w_mat, scale, shift)
    return out.reshape(N, H, W, C)


def reference_forward_nchw(x, w_oihw, gamma, beta, mean, var, eps=1e-5):
    """Pure-JAX reference matching the PyTorch module (BN in eval mode)."""
    y = jax.lax.conv_general_dilated(
        x, w_oihw, window_strides=(1, 1), padding=((1, 1), (1, 1)),
        dimension_numbers=("NCHW", "OIHW", "NCHW"))
    s = gamma / jnp.sqrt(var + eps)
    y = y * s[None, :, None, None] + (beta - mean * s)[None, :, None, None]
    y = jnp.maximum(y, 0.0)
    return y + x


if __name__ == "__main__":
    N, C, H, W = 2, 32, 16, 16
    eps = 1e-5

    key = jax.random.PRNGKey(0)
    k_x, k_w, k_g, k_b, k_m, k_v = jax.random.split(key, 6)

    # Input in the PyTorch (NCHW) convention.
    x_nchw = jax.random.normal(k_x, (N, C, H, W), jnp.float32)

    # Conv2d(ch, ch, 3, 1, 1, 1, bias=False) weight: (out, in, 3, 3)
    fan_in = C * 3 * 3
    bound = 1.0 / (fan_in ** 0.5)
    w_oihw = jax.random.uniform(k_w, (C, C, 3, 3), jnp.float32, -bound, bound)

    # BatchNorm2d(ch) parameters / running statistics.
    # TODO(synk): PyTorch default mode is train() (batch statistics); eval-mode
    # running-stat semantics are implemented here.
    gamma = 1.0 + 0.1 * jax.random.normal(k_g, (C,), jnp.float32)
    beta = 0.1 * jax.random.normal(k_b, (C,), jnp.float32)
    run_mean = 0.1 * jax.random.normal(k_m, (C,), jnp.float32)
    run_var = 1.0 + 0.1 * jax.random.uniform(k_v, (C,), jnp.float32)

    # Fold BN into per-channel scale/shift; reshape conv weights once at the
    # wrapper into the im2col layout (dy, dx, Cin) x Cout = (9*C, C).
    scale = (gamma / jnp.sqrt(run_var + eps)).reshape(1, C)
    shift = (beta - run_mean * gamma / jnp.sqrt(run_var + eps)).reshape(1, C)
    w_mat = jnp.transpose(w_oihw, (2, 3, 1, 0)).reshape(9 * C, C)

    # NCHW -> NHWC for the TPU kernel.
    x_nhwc = jnp.transpose(x_nchw, (0, 2, 3, 1))

    out_nhwc = basic_layer_forward(x_nhwc, w_mat, scale, shift)
    out_nhwc = jax.block_until_ready(out_nhwc)
    out_nchw = jnp.transpose(out_nhwc, (0, 3, 1, 2))

    ref = reference_forward_nchw(x_nchw, w_oihw, gamma, beta, run_mean, run_var, eps)
    ref = jax.block_until_ready(ref)

    assert jnp.allclose(out_nchw, ref, rtol=1e-4, atol=1e-4), (
        float(jnp.max(jnp.abs(out_nchw - ref))))
    print("KERNEL_OK")
</pallas_src>

<mosaic_0001>
module attributes {stable_mosaic.version = 11 : i64} {
  func.func @_basic_layer_kernel(%arg0: i32, %arg1: memref<1x256x32xf32, #tpu.memory_space<vmem>>, %arg2: memref<288x32xf32, #tpu.memory_space<vmem>>, %arg3: memref<1x32xf32, #tpu.memory_space<vmem>>, %arg4: memref<1x32xf32, #tpu.memory_space<vmem>>, %arg5: memref<1x256x32xf32, #tpu.memory_space<vmem>>, %arg6: memref<18x18x32xf32, #tpu.memory_space<vmem>>) attributes {dimension_semantics = [#tpu.dimension_semantics<parallel>], iteration_bounds = array<i64: 2>, scalar_prefetch = 0 : i64, scratch_operands = 1 : i64, tpu.core_type = #tpu.core_type<tc>, window_params = [{transform_indices = @transform_0, window_bounds = array<i64: 1, 256, 32>}, {pipeline_mode = #tpu.pipeline_mode<synchronous>, transform_indices = @transform_1, window_bounds = array<i64: 288, 32>}, {pipeline_mode = #tpu.pipeline_mode<synchronous>, transform_indices = @transform_2, window_bounds = array<i64: 1, 32>}, {pipeline_mode = #tpu.pipeline_mode<synchronous>, transform_indices = @transform_3, window_bounds = array<i64: 1, 32>}, {transform_indices = @transform_4, window_bounds = array<i64: 1, 256, 32>}]} {
    %c0 = arith.constant 0 : index
    %c0_0 = arith.constant 0 : index
    %c0_1 = arith.constant 0 : index
    %0 = vector.load %arg1[%c0, %c0_0, %c0_1] : memref<1x256x32xf32, #tpu.memory_space<vmem>>, vector<1x256x32xf32>
    %1 = vector.shape_cast %0 : vector<1x256x32xf32> to vector<256x32xf32>
    %cst = arith.constant 0.000000e+00 : f32
    %2 = vector.broadcast %cst : f32 to vector<18x18x32xf32>
    %c0_2 = arith.constant 0 : index
    %c0_3 = arith.constant 0 : index
    %c0_4 = arith.constant 0 : index
    %3 = vector.load %arg6[%c0_2, %c0_3, %c0_4] : memref<18x18x32xf32, #tpu.memory_space<vmem>>, vector<18x18x32xf32>
    tpu.vector_store %arg6[%c0_2, %c0_3, %c0_4], %2 {strides = array<i32>} : memref<18x18x32xf32, #tpu.memory_space<vmem>>, vector<18x18x32xf32>,
    %4 = vector.shape_cast %1 : vector<256x32xf32> to vector<16x16x32xf32>
    %c1 = arith.constant 1 : index
    %c1_5 = arith.constant 1 : index
    %c0_6 = arith.constant 0 : index
    %5 = vector.load %arg6[%c1, %c1_5, %c0_6] : memref<18x18x32xf32, #tpu.memory_space<vmem>>, vector<16x16x32xf32>
    tpu.vector_store %arg6[%c1, %c1_5, %c0_6], %4 {strides = array<i32>} : memref<18x18x32xf32, #tpu.memory_space<vmem>>, vector<16x16x32xf32>,
    %c0_7 = arith.constant 0 : index
    %c0_8 = arith.constant 0 : index
    %c0_9 = arith.constant 0 : index
    %6 = vector.load %arg6[%c0_7, %c0_8, %c0_9] : memref<18x18x32xf32, #tpu.memory_space<vmem>>, vector<18x18x32xf32>
    %7 = vector.extract_strided_slice %6 {offsets = [0, 0, 0], sizes = [16, 16, 32], strides = [1, 1, 1]} : vector<18x18x32xf32> to vector<16x16x32xf32>
    %8 = vector.shape_cast %7 : vector<16x16x32xf32> to vector<256x32xf32>
    %9 = vector.extract_strided_slice %6 {offsets = [0, 1, 0], sizes = [16, 16, 32], strides = [1, 1, 1]} : vector<18x18x32xf32> to vector<16x16x32xf32>
    %10 = vector.shape_cast %9 : vector<16x16x32xf32> to vector<256x32xf32>
    %11 = vector.extract_strided_slice %6 {offsets = [0, 2, 0], sizes = [16, 16, 32], strides = [1, 1, 1]} : vector<18x18x32xf32> to vector<16x16x32xf32>
    %12 = vector.shape_cast %11 : vector<16x16x32xf32> to vector<256x32xf32>
    %13 = vector.extract_strided_slice %6 {offsets = [1, 0, 0], sizes = [16, 16, 32], strides = [1, 1, 1]} : vector<18x18x32xf32> to vector<16x16x32xf32>
    %14 = vector.shape_cast %13 : vector<16x16x32xf32> to vector<256x32xf32>
    %15 = vector.extract_strided_slice %6 {offsets = [1, 1, 0], sizes = [16, 16, 32], strides = [1, 1, 1]} : vector<18x18x32xf32> to vector<16x16x32xf32>
    %16 = vector.shape_cast %15 : vector<16x16x32xf32> to vector<256x32xf32>
    %17 = vector.extract_strided_slice %6 {offsets = [1, 2, 0], sizes = [16, 16, 32], strides = [1, 1, 1]} : vector<18x18x32xf32> to vector<16x16x32xf32>
    %18 = vector.shape_cast %17 : vector<16x16x32xf32> to vector<256x32xf32>
    %19 = vector.extract_strided_slice %6 {offsets = [2, 0, 0], sizes = [16, 16, 32], strides = [1, 1, 1]} : vector<18x18x32xf32> to vector<16x16x32xf32>
    %20 = vector.shape_cast %19 : vector<16x16x32xf32> to vector<256x32xf32>
    %21 = vector.extract_strided_slice %6 {offsets = [2, 1, 0], sizes = [16, 16, 32], strides = [1, 1, 1]} : vector<18x18x32xf32> to vector<16x16x32xf32>
    %22 = vector.shape_cast %21 : vector<16x16x32xf32> to vector<256x32xf32>
    %23 = vector.extract_strided_slice %6 {offsets = [2, 2, 0], sizes = [16, 16, 32], strides = [1, 1, 1]} : vector<18x18x32xf32> to vector<16x16x32xf32>
    %24 = vector.shape_cast %23 : vector<16x16x32xf32> to vector<256x32xf32>
    %25 = tpu.concatenate %8, %10, %12, %14, %16, %18, %20, %22, %24 in 1 : vector<256x32xf32>, vector<256x32xf32>, vector<256x32xf32>, vector<256x32xf32>, vector<256x32xf32>, vector<256x32xf32>, vector<256x32xf32>, vector<256x32xf32>, vector<256x32xf32> -> vector<256x288xf32>
    %c0_10 = arith.constant 0 : index
    %c0_11 = arith.constant 0 : index
    %26 = vector.load %arg2[%c0_10, %c0_11] : memref<288x32xf32, #tpu.memory_space<vmem>>, vector<288x32xf32>
    %cst_12 = arith.constant dense<0.000000e+00> : vector<256x32xf32>
    %27 = tpu.matmul %25, %26, %cst_12 {dimension_numbers = #tpu.dot_dimension_numbers<[1], [0], [0], [1], [0, 0, 1, 1], [], []>} : vector<256x288xf32>, vector<288x32xf32>, vector<256x32xf32> -> vector<256x32xf32>
    %c0_13 = arith.constant 0 : index
    %c0_14 = arith.constant 0 : index
    %28 = vector.load %arg3[%c0_13, %c0_14] : memref<1x32xf32, #tpu.memory_space<vmem>>, vector<1x32xf32>
    %29 = vector.broadcast %28 : vector<1x32xf32> to vector<256x32xf32>
    %30 = arith.mulf %27, %29 : vector<256x32xf32>
    %c0_15 = arith.constant 0 : index
    %c0_16 = arith.constant 0 : index
    %31 = vector.load %arg4[%c0_15, %c0_16] : memref<1x32xf32, #tpu.memory_space<vmem>>, vector<1x32xf32>
    %32 = vector.broadcast %31 : vector<1x32xf32> to vector<256x32xf32>
    %33 = arith.addf %30, %32 : vector<256x32xf32>
    %cst_17 = arith.constant 0.000000e+00 : f32
    %34 = vector.broadcast %cst_17 : f32 to vector<256x32xf32>
    %35 = arith.maximumf %33, %34 : vector<256x32xf32>
    %36 = arith.addf %35, %1 : vector<256x32xf32>
    %37 = vector.shape_cast %36 : vector<256x32xf32> to vector<1x256x32xf32>
    %c0_18 = arith.constant 0 : index
    %c0_19 = arith.constant 0 : index
    %c0_20 = arith.constant 0 : index
    %38 = vector.load %arg5[%c0_18, %c0_19, %c0_20] : memref<1x256x32xf32, #tpu.memory_space<vmem>>, vector<1x256x32xf32>
    tpu.vector_store %arg5[%c0_18, %c0_19, %c0_20], %37 {strides = array<i32>} : memref<1x256x32xf32, #tpu.memory_space<vmem>>, vector<1x256x32xf32>,
    return
  }
  func.func @transform_0(%arg0: i32) -> (i32, i32, i32) {
    %c0_i32 = arith.constant 0 : i32
    %c0_i32_0 = arith.constant 0 : i32
    %c0_i32_1 = arith.constant 0 : i32
    return %arg0, %c0_i32, %c0_i32_0 : i32, i32, i32
  }
  func.func @transform_1(%arg0: i32) -> (i32, i32) {
    %c0_i32 = arith.constant 0 : i32
    %c0_i32_0 = arith.constant 0 : i32
    %c0_i32_1 = arith.constant 0 : i32
    return %c0_i32, %c0_i32_0 : i32, i32
  }
  func.func @transform_2(%arg0: i32) -> (i32, i32) {
    %c0_i32 = arith.constant 0 : i32
    %c0_i32_0 = arith.constant 0 : i32
    %c0_i32_1 = arith.constant 0 : i32
    return %c0_i32, %c0_i32_0 : i32, i32
  }
  func.func @transform_3(%arg0: i32) -> (i32, i32) {
    %c0_i32 = arith.constant 0 : i32
    %c0_i32_0 = arith.constant 0 : i32
    %c0_i32_1 = arith.constant 0 : i32
    return %c0_i32, %c0_i32_0 : i32, i32
  }
  func.func @transform_4(%arg0: i32) -> (i32, i32, i32) {
    %c0_i32 = arith.constant 0 : i32
    %c0_i32_0 = arith.constant 0 : i32
    %c0_i32_1 = arith.constant 0 : i32
    return %arg0, %c0_i32, %c0_i32_0 : i32, i32, i32
  }
}

</mosaic_0001>

<llo_original>
// kernel: tpu_custom_call.1
$region0: #{tpu_custom_call.1}
  #allocation0 [shape = 'u32[]', space=smem, size = 0x4, offset = 0x4, fixed_abs, tag = 'smem constant byte address 0x4 - core index']
  #allocation1 [shape = 'u32[144,128]{1,0:T(1,128)}', space=vmem, size = 0x12000, scoped, tag = 'internal scratch']
  #allocation2 [shape = 'f32[18,18,32]{2,1,0:T(8,128)}', space=vmem, size = 0x36000, scoped, tag = 'scratch operand']
  %s0 = inlined_call_operand.vmem [shape: f32[2,256,32], index: 0, kind: input, shape index: {}]
  %s1 = inlined_call_operand.vmem [shape: f32[288,32], index: 1, kind: input, shape index: {}]
  %s2 = inlined_call_operand.vmem [shape: f32[1,32], index: 2, kind: input, shape index: {}]
  %s3 = inlined_call_operand.vmem [shape: f32[1,32], index: 3, kind: input, shape index: {}]
  %s4 = inlined_call_operand.vmem [shape: f32[2,256,32], index: 4, kind: output, shape index: {}]
  %s5 = sld [smem:[#allocation0]]
  $region49: #{tpu_custom_call.1} parent=0
    _
  %s7 = ssub.s32 1, %s5
  %s8 = scalar_select 0, %s7, %s5
  loop: start=0, step=1, limit=4
  $region2: #{tpu_custom_call.1} parent=0 // loop_pre_header
    _
  $region3: #{tpu_custom_call.1} parent=0 // loop_header
    %s10 = sphi 0, %s14
    %p11 = scmp.ge.s32.totalorder %s10, 4
    %s20 = sphi 0, %s22
    %s23 = sphi 0, %s20
    %s24 = sphi 0, %s23
    %s40 = sphi 0, %s24
    %s44 = sphi 0, %s44
    %s46 = sphi 0, %s44
    %s47 = sphi 0, %s46
    %s61 = sphi 0, %s47
    %s65 = sphi 0, %s65
    %s67 = sphi 0, %s65
    %s68 = sphi 0, %s67
    %s82 = sphi 0, %s68
    %s86 = sphi 0, %s86
    %s88 = sphi 0, %s86
    %s89 = sphi 0, %s88
    %s103 = sphi 0, %s89
    %s109 = sphi 0, %s111
    %s112 = sphi 0, %s109
    %s113 = sphi 0, %s112
    %s129 = sphi 0, %s113
  $region4: #{tpu_custom_call.1} parent=0 // loop_header_branch
    %13 = sbr.rel (%p11) target = $region8
  $region5: #{tpu_custom_call.1} parent=0 // loop_body
    %s15 = ssub.s32 %s10, 1
    %s16 = ssub.s32 %s10, 2
    %s17 = sadd.s32 %s10, 1
    %s18 = ssub.s32 %s10, %s17
    %p19 = scmp.eq.s32.totalorder %s18, 0
    %s21 = sadd.s32 %s20, 1
    %s22 = scalar_select %p19, %s20, %s21
    %p25 = pneg %p19
    %p26 = scmp.eq.s32.totalorder %s10, 1
    %p27 = por %p25, %p26
    %p28 = scmp.ne.s32.totalorder %s20, %s23
    %p29 = scmp.eq.s32.totalorder %s10, 0
    %p30 = por %p28, %p29
    %p31 = scmp.ne.s32.totalorder %s20, %s23
    %p32 = scmp.eq.s32.totalorder %s15, 1
    %p33 = por %p31, %p32
    %p34 = scmp.ne.s32.totalorder %s23, %s24
    %p35 = scmp.eq.s32.totalorder %s15, 0
    %p36 = por %p34, %p35
    %p37 = scmp.ne.s32.totalorder %s23, %s24
    %p38 = scmp.eq.s32.totalorder %s16, 1
    %p39 = por %p37, %p38
    %p41 = scmp.ne.s32.totalorder %s24, %s40
    %p42 = scmp.eq.s32.totalorder %s16, 0
    %p43 = por %p41, %p42
    %s45 = sadd.s32 %s44, 1
    %p48 = scmp.eq.s32.totalorder %s10, 1
    %p49 = scmp.ne.s32.totalorder %s44, %s46
    %p50 = scmp.eq.s32.totalorder %s10, 0
    %p51 = por %p49, %p50
    %p52 = scmp.ne.s32.totalorder %s44, %s46
    %p53 = scmp.eq.s32.totalorder %s15, 1
    %p54 = por %p52, %p53
    %p55 = scmp.ne.s32.totalorder %s46, %s47
    %p56 = scmp.eq.s32.totalorder %s15, 0
    %p57 = por %p55, %p56
    %p58 = scmp.ne.s32.totalorder %s46, %s47
    %p59 = scmp.eq.s32.totalorder %s16, 1
    %p60 = por %p58, %p59
    %p62 = scmp.ne.s32.totalorder %s47, %s61
    %p63 = scmp.eq.s32.totalorder %s16, 0
    %p64 = por %p62, %p63
    %s66 = sadd.s32 %s65, 1
    %p69 = scmp.eq.s32.totalorder %s10, 1
    %p70 = scmp.ne.s32.totalorder %s65, %s67
    %p71 = scmp.eq.s32.totalorder %s10, 0
    %p72 = por %p70, %p71
    %p73 = scmp.ne.s32.totalorder %s65, %s67
    %p74 = scmp.eq.s32.totalorder %s15, 1
    %p75 = por %p73, %p74
    %p76 = scmp.ne.s32.totalorder %s67, %s68
    %p77 = scmp.eq.s32.totalorder %s15, 0
    %p78 = por %p76, %p77
    %p79 = scmp.ne.s32.totalorder %s67, %s68
    %p80 = scmp.eq.s32.totalorder %s16, 1
    %p81 = por %p79, %p80
    %p83 = scmp.ne.s32.totalorder %s68, %s82
    %p84 = scmp.eq.s32.totalorder %s16, 0
    %p85 = por %p83, %p84
    %s87 = sadd.s32 %s86, 1
    %p90 = scmp.eq.s32.totalorder %s10, 1
    %p91 = scmp.ne.s32.totalorder %s86, %s88
    %p92 = scmp.eq.s32.totalorder %s10, 0
    %p93 = por %p91, %p92
    %p94 = scmp.ne.s32.totalorder %s86, %s88
    %p95 = scmp.eq.s32.totalorder %s15, 1
    %p96 = por %p94, %p95
    %p97 = scmp.ne.s32.totalorder %s88, %s89
    %p98 = scmp.eq.s32.totalorder %s15, 0
    %p99 = por %p97, %p98
    %p100 = scmp.ne.s32.totalorder %s88, %s89
    %p101 = scmp.eq.s32.totalorder %s16, 1
    %p102 = por %p100, %p101
    %p104 = scmp.ne.s32.totalorder %s89, %s103
    %p105 = scmp.eq.s32.totalorder %s16, 0
    %p106 = por %p104, %p105
    %s107 = ssub.s32 %s10, %s17
    %p108 = scmp.eq.s32.totalorder %s107, 0
    %s110 = sadd.s32 %s109, 1
    %s111 = scalar_select %p108, %s109, %s110
    %p114 = pneg %p108
    %p115 = scmp.eq.s32.totalorder %s10, 1
    %p116 = por %p114, %p115
    %p117 = scmp.ne.s32.totalorder %s109, %s112
    %p118 = scmp.eq.s32.totalorder %s10, 0
    %p119 = por %p117, %p118
    %p120 = scmp.ne.s32.totalorder %s109, %s112
    %p121 = scmp.eq.s32.totalorder %s15, 1
    %p122 = por %p120, %p121
    %p123 = scmp.ne.s32.totalorder %s112, %s113
    %p124 = scmp.eq.s32.totalorder %s15, 0
    %p125 = por %p123, %p124
    %p126 = scmp.ne.s32.totalorder %s112, %s113
    %p127 = scmp.eq.s32.totalorder %s16, 1
    %p128 = por %p126, %p127
    %p130 = scmp.ne.s32.totalorder %s113, %s129
    %p131 = scmp.eq.s32.totalorder %s16, 0
    %p132 = por %p130, %p131
    %p133 = scmp.le.s32.totalorder 1, %s10
    %p134 = scmp.lt.s32.totalorder %s10, 3
    %p135 = pnand %p133, %p134
    %p136 = pneg %p135
    // Predicated region
    $region9: #{tpu_custom_call.1} parent=5 // pred_check
      _
    $region10: #{tpu_custom_call.1} parent=5 // pred_check_branch
      %138 = sbr.rel (%p135) target = $region12
    $region11: #{tpu_custom_call.1} parent=5 // pred_region
      %s139 = ssub.s32 %s10, 1
      // Predicated region
      $region13: #{tpu_custom_call.1} parent=11 // pred_check
        %p140 = pneg %p57
      $region14: #{tpu_custom_call.1} parent=11 // pred_check_branch
        %142 = sbr.rel (%p140) target = $region16
      $region15: #{tpu_custom_call.1} parent=11 // pred_region
        _
      $region16: #{tpu_custom_call.1} parent=11 // pred_fallthru
        _
      // Predicated region
      $region17: #{tpu_custom_call.1} parent=11 // pred_check
        %p143 = pneg %p78
      $region18: #{tpu_custom_call.1} parent=11 // pred_check_branch
        %145 = sbr.rel (%p143) target = $region20
      $region19: #{tpu_custom_call.1} parent=11 // pred_region
        _
      $region20: #{tpu_custom_call.1} parent=11 // pred_fallthru
        _
      // Predicated region
      $region21: #{tpu_custom_call.1} parent=11 // pred_check
        %p146 = pneg %p99
      $region22: #{tpu_custom_call.1} parent=11 // pred_check_branch
        %148 = sbr.rel (%p146) target = $region24
      $region23: #{tpu_custom_call.1} parent=11 // pred_region
        _
      $region24: #{tpu_custom_call.1} parent=11 // pred_fallthru
        _
    $region12: #{tpu_custom_call.1} parent=5 // pred_fallthru
      _
    %p149 = scmp.lt.s32.totalorder %s10, 2
    // Predicated region
    $region25: #{tpu_custom_call.1} parent=5 // pred_check
      %p150 = pneg %p149
    $region26: #{tpu_custom_call.1} parent=5 // pred_check_branch
      %152 = sbr.rel (%p150) target = $region28
    $region27: #{tpu_custom_call.1} parent=5 // pred_region
      // Predicated region
      $region29: #{tpu_custom_call.1} parent=27 // pred_check
        %p153 = pneg %p30
      $region30: #{tpu_custom_call.1} parent=27 // pred_check_branch
        %155 = sbr.rel (%p153) target = $region32
      $region31: #{tpu_custom_call.1} parent=27 // pred_region
        %p156 = scmp.lt.s32.totalorder %s10, 1
        %s157 = scalar_select %p156, %s10, 1
        %s158 = smul.addr %s157, 32
        %s159 = smul.addr %s158, 8
        %s160 = scalar_lea.vmem %s0, %s159
      $region32: #{tpu_custom_call.1} parent=27 // pred_fallthru
        _
    $region28: #{tpu_custom_call.1} parent=5 // pred_fallthru
      _
    %p161 = scmp.le.s32.totalorder 1, %s10
    %p162 = scmp.lt.s32.totalorder %s10, 3
    %p163 = pnand %p161, %p162
    %p164 = pneg %p163
    // Predicated region
    $region33: #{tpu_custom_call.1} parent=5 // pred_check
      _
    $region34: #{tpu_custom_call.1} parent=5 // pred_check_branch
      %166 = sbr.rel (%p163) target = $region36
    $region35: #{tpu_custom_call.1} parent=5 // pred_region
      %s167 = ssub.s32 %s10, 1
      %p168 = scmp.lt.s32.totalorder %s15, 1
      %s169 = scalar_select %p168, %s15, 1
      %s170 = smul.addr %s169, 32
      %s171 = smul.addr %s170, 8
      %s172 = scalar_lea.vmem %s0, %s171
      %p173 = pneg %p36
      %p174 = pneg %p33
      %p175 = pneg %p57
      %p176 = pneg %p54
      %p177 = pneg %p78
      %p178 = pneg %p75
      %p179 = pneg %p99
      %p180 = pneg %p96
      %p181 = pneg %p125
      %p182 = pneg %p122
      %p183 = scmp.lt.s32.totalorder %s15, 1
      %s184 = scalar_select %p183, %s15, 1
      %s185 = smul.addr %s184, 32
      %s186 = smul.addr %s185, 8
      %s187 = scalar_lea.vmem %s4, %s186
      %p188 = scmp.lt.s32.totalorder %s15, 1
      %s189 = scalar_select %p188, %s15, 1
      %s190 = smul.addr %s189, 32
      %s191 = smul.addr %s190, 8
      %s192 = scalar_lea.vmem %s0, %s191
      %p193 = scmp.lt.s32.totalorder %s15, 1
      %s194 = scalar_select %p193, %s15, 1
      %s195 = smul.addr %s194, 32
      %s196 = smul.addr %s195, 8
      %s197 = scalar_lea.vmem %s4, %s196
      %v198 = vld [vmem:[%s192] sm:$0xff]
      %v199 = vld [vmem:[%s192 + $0x8] sm:$0xff]
      %v200 = vld [vmem:[%s192 + $0x10] sm:$0xff]
      %v201 = vld [vmem:[%s192 + $0x18] sm:$0xff]
      %v202 = vld [vmem:[%s192 + $0x20] sm:$0xff]
      %v203 = vld [vmem:[%s192 + $0x28] sm:$0xff]
      %v204 = vld [vmem:[%s192 + $0x30] sm:$0xff]
      %v205 = vld [vmem:[%s192 + $0x38] sm:$0xff]
      %v206 = vld [vmem:[%s192 + $0x40] sm:$0xff]
      %v207 = vld [vmem:[%s192 + $0x48] sm:$0xff]
      %v208 = vld [vmem:[%s192 + $0x50] sm:$0xff]
      %v209 = vld [vmem:[%s192 + $0x58] sm:$0xff]
      %v210 = vld [vmem:[%s192 + $0x60] sm:$0xff]
      %v211 = vld [vmem:[%s192 + $0x68] sm:$0xff]
      %v212 = vld [vmem:[%s192 + $0x70] sm:$0xff]
      %v213 = vld [vmem:[%s192 + $0x78] sm:$0xff]
      %v214 = vld [vmem:[%s192 + $0x80] sm:$0xff]
      %v215 = vld [vmem:[%s192 + $0x88] sm:$0xff]
      %v216 = vld [vmem:[%s192 + $0x90] sm:$0xff]
      %v217 = vld [vmem:[%s192 + $0x98] sm:$0xff]
      %v218 = vld [vmem:[%s192 + $0xa0] sm:$0xff]
      %v219 = vld [vmem:[%s192 + $0xa8] sm:$0xff]
      %v220 = vld [vmem:[%s192 + $0xb0] sm:$0xff]
      %v221 = vld [vmem:[%s192 + $0xb8] sm:$0xff]
      %v222 = vld [vmem:[%s192 + $0xc0] sm:$0xff]
      %v223 = vld [vmem:[%s192 + $0xc8] sm:$0xff]
      %v224 = vld [vmem:[%s192 + $0xd0] sm:$0xff]
      %v225 = vld [vmem:[%s192 + $0xd8] sm:$0xff]
      %v226 = vld [vmem:[%s192 + $0xe0] sm:$0xff]
      %v227 = vld [vmem:[%s192 + $0xe8] sm:$0xff]
      %v228 = vld [vmem:[%s192 + $0xf0] sm:$0xff]
      %v229 = vld [vmem:[%s192 + $0xf8] sm:$0xff]
      %vm230 = vcmask 261120
      %231 = vst.msk [vmem:[#allocation2] sm:$0xff] %vm230, 0.0
      %232 = vst.msk [vmem:[#allocation2 + $0x8] sm:$0xff] %vm230, 0.0
      %vm233 = vcmask 254976
      %234 = vst.msk [vmem:[#allocation2 + $0x10] sm:$0x3] %vm233, 0.0
      %235 = vst.msk [vmem:[#allocation2 + $0x18] sm:$0xff] %vm230, 0.0
      %236 = vst.msk [vmem:[#allocation2 + $0x20] sm:$0xff] %vm230, 0.0
      %237 = vst.msk [vmem:[#allocation2 + $0x28] sm:$0x3] %vm233, 0.0
      %238 = vst.msk [vmem:[#allocation2 + $0x30] sm:$0xff] %vm230, 0.0
      %239 = vst.msk [vmem:[#allocation2 + $0x38] sm:$0xff] %vm230, 0.0
      %240 = vst.msk [vmem:[#allocation2 + $0x40] sm:$0x3] %vm233, 0.0
      %241 = vst.msk [vmem:[#allocation2 + $0x48] sm:$0xff] %vm230, 0.0
      %242 = vst.msk [vmem:[#allocation2 + $0x50] sm:$0xff] %vm230, 0.0
      %243 = vst.msk [vmem:[#allocation2 + $0x58] sm:$0x3] %vm233, 0.0
      %244 = vst.msk [vmem:[#allocation2 + $0x60] sm:$0xff] %vm230, 0.0
      %245 = vst.msk [vmem:[#allocation2 + $0x68] sm:$0xff] %vm230, 0.0
      %246 = vst.msk [vmem:[#allocation2 + $0x70] sm:$0x3] %vm233, 0.0
      %247 = vst.msk [vmem:[#allocation2 + $0x78] sm:$0xff] %vm230, 0.0
      %248 = vst.msk [vmem:[#allocation2 + $0x80] sm:$0xff] %vm230, 0.0
      %249 = vst.msk [vmem:[#allocation2 + $0x88] sm:$0x3] %vm233, 0.0
      %250 = vst.msk [vmem:[#allocation2 + $0x90] sm:$0xff] %vm230, 0.0
      %251 = vst.msk [vmem:[#allocation2 + $0x98] sm:$0xff] %vm230, 0.0
      %252 = vst.msk [vmem:[#allocation2 + $0xa0] sm:$0x3] %vm233, 0.0
      %253 = vst.msk [vmem:[#allocation2 + $0xa8] sm:$0xff] %vm230, 0.0
      %254 = vst.msk [vmem:[#allocation2 + $0xb0] sm:$0xff] %vm230, 0.0
      %255 = vst.msk [vmem:[#allocation2 + $0xb8] sm:$0x3] %vm233, 0.0
      %256 = vst.msk [vmem:[#allocation2 + $0xc0] sm:$0xff] %vm230, 0.0
      %257 = vst.msk [vmem:[#allocation2 + $0xc8] sm:$0xff] %vm230, 0.0
      %258 = vst.msk [vmem:[#allocation2 + $0xd0] sm:$0x3] %vm233, 0.0
      %259 = vst.msk [vmem:[#allocation2 + $0xd8] sm:$0xff] %vm230, 0.0
      %260 = vst.msk [vmem:[#allocation2 + $0xe0] sm:$0xff] %vm230, 0.0
      %261 = vst.msk [vmem:[#allocation2 + $0xe8] sm:$0x3] %vm233, 0.0
      %262 = vst.msk [vmem:[#allocation2 + $0xf0] sm:$0xff] %vm230, 0.0
      %263 = vst.msk [vmem:[#allocation2 + $0xf8] sm:$0xff] %vm230, 0.0
      %264 = vst.msk [vmem:[#allocation2 + $0x100] sm:$0x3] %vm233, 0.0
      %265 = vst.msk [vmem:[#allocation2 + $0x108] sm:$0xff] %vm230, 0.0
      %266 = vst.msk [vmem:[#allocation2 + $0x110] sm:$0xff] %vm230, 0.0
      %267 = vst.msk [vmem:[#allocation2 + $0x118] sm:$0x3] %vm233, 0.0
      %268 = vst.msk [vmem:[#allocation2 + $0x120] sm:$0xff] %vm230, 0.0
      %269 = vst.msk [vmem:[#allocation2 + $0x128] sm:$0xff] %vm230, 0.0
      %270 = vst.msk [vmem:[#allocation2 + $0x130] sm:$0x3] %vm233, 0.0
      %271 = vst.msk [vmem:[#allocation2 + $0x138] sm:$0xff] %vm230, 0.0
      %272 = vst.msk [vmem:[#allocation2 + $0x140] sm:$0xff] %vm230, 0.0
      %273 = vst.msk [vmem:[#allocation2 + $0x148] sm:$0x3] %vm233, 0.0
      %274 = vst.msk [vmem:[#allocation2 + $0x150] sm:$0xff] %vm230, 0.0
      %275 = vst.msk [vmem:[#allocation2 + $0x158] sm:$0xff] %vm230, 0.0
      %276 = vst.msk [vmem:[#allocation2 + $0x160] sm:$0x3] %vm233, 0.0
      %277 = vst.msk [vmem:[#allocation2 + $0x168] sm:$0xff] %vm230, 0.0
      %278 = vst.msk [vmem:[#allocation2 + $0x170] sm:$0xff] %vm230, 0.0
      %279 = vst.msk [vmem:[#allocation2 + $0x178] sm:$0x3] %vm233, 0.0
      %280 = vst.msk [vmem:[#allocation2 + $0x180] sm:$0xff] %vm230, 0.0
      %281 = vst.msk [vmem:[#allocation2 + $0x188] sm:$0xff] %vm230, 0.0
      %282 = vst.msk [vmem:[#allocation2 + $0x190] sm:$0x3] %vm233, 0.0
      %283 = vst.msk [vmem:[#allocation2 + $0x198] sm:$0xff] %vm230, 0.0
      %284 = vst.msk [vmem:[#allocation2 + $0x1a0] sm:$0xff] %vm230, 0.0
      %285 = vst.msk [vmem:[#allocation2 + $0x1a8] sm:$0x3] %vm233, 0.0
      %s286 = scalar_lea.vmem [#allocation2], 24
      %287 = vst.msk [vmem:[%s286 + $0x1] sm:$0xff] %vm230, %v198
      %288 = vst.msk [vmem:[%s286 + $0x9] sm:$0xff] %vm230, %v199
      %289 = vst.msk [vmem:[%s286 + $0x19] sm:$0xff] %vm230, %v200
      %290 = vst.msk [vmem:[%s286 + $0x21] sm:$0xff] %vm230, %v201
      %291 = vst.msk [vmem:[%s286 + $0x31] sm:$0xff] %vm230, %v202
      %292 = vst.msk [vmem:[%s286 + $0x39] sm:$0xff] %vm230, %v203
      %293 = vst.msk [vmem:[%s286 + $0x49] sm:$0xff] %vm230, %v204
      %294 = vst.msk [vmem:[%s286 + $0x51] sm:$0xff] %vm230, %v205
      %295 = vst.msk [vmem:[%s286 + $0x61] sm:$0xff] %vm230, %v206
      %296 = vst.msk [vmem:[%s286 + $0x69] sm:$0xff] %vm230, %v207
      %297 = vst.msk [vmem:[%s286 + $0x79] sm:$0xff] %vm230, %v208
      %298 = vst.msk [vmem:[%s286 + $0x81] sm:$0xff] %vm230, %v209
      %299 = vst.msk [vmem:[%s286 + $0x91] sm:$0xff] %vm230, %v210
      %300 = vst.msk [vmem:[%s286 + $0x99] sm:$0xff] %vm230, %v211
      %301 = vst.msk [vmem:[%s286 + $0xa9] sm:$0xff] %vm230, %v212
      %302 = vst.msk [vmem:[%s286 + $0xb1] sm:$0xff] %vm230, %v213
      %303 = vst.msk [vmem:[%s286 + $0xc1] sm:$0xff] %vm230, %v214
      %304 = vst.msk [vmem:[%s286 + $0xc9] sm:$0xff] %vm230, %v215
      %305 = vst.msk [vmem:[%s286 + $0xd9] sm:$0xff] %vm230, %v216
      %306 = vst.msk [vmem:[%s286 + $0xe1] sm:$0xff] %vm230, %v217
      %307 = vst.msk [vmem:[%s286 + $0xf1] sm:$0xff] %vm230, %v218
      %308 = vst.msk [vmem:[%s286 + $0xf9] sm:$0xff] %vm230, %v219
      %309 = vst.msk [vmem:[%s286 + $0x109] sm:$0xff] %vm230, %v220
      %310 = vst.msk [vmem:[%s286 + $0x111] sm:$0xff] %vm230, %v221
      %311 = vst.msk [vmem:[%s286 + $0x121] sm:$0xff] %vm230, %v222
      %312 = vst.msk [vmem:[%s286 + $0x129] sm:$0xff] %vm230, %v223
      %313 = vst.msk [vmem:[%s286 + $0x139] sm:$0xff] %vm230, %v224
      %314 = vst.msk [vmem:[%s286 + $0x141] sm:$0xff] %vm230, %v225
      %315 = vst.msk [vmem:[%s286 + $0x151] sm:$0xff] %vm230, %v226
      %316 = vst.msk [vmem:[%s286 + $0x159] sm:$0xff] %vm230, %v227
      %317 = vst.msk [vmem:[%s286 + $0x169] sm:$0xff] %vm230, %v228
      %318 = vst.msk [vmem:[%s286 + $0x171] sm:$0xff] %vm230, %v229
      %v319 = vld [vmem:[#allocation2] sm:$0xff]
      %v320 = vld [vmem:[#allocation2 + $0x8] sm:$0xff]
      %v321 = vld [vmem:[#allocation2 + $0x10] sm:$0x3]
      %v322 = vld [vmem:[#allocation2 + $0x18] sm:$0xff]
      %v323 = vld [vmem:[#allocation2 + $0x20] sm:$0xff]
      %v324 = vld [vmem:[#allocation2 + $0x28] sm:$0x3]
      %v325 = vld [vmem:[#allocation2 + $0x30] sm:$0xff]
      %v326 = vld [vmem:[#allocation2 + $0x38] sm:$0xff]
      %v327 = vld [vmem:[#allocation2 + $0x40] sm:$0x3]
      %v328 = vld [vmem:[#allocation2 + $0x48] sm:$0xff]
      %v329 = vld [vmem:[#allocation2 + $0x50] sm:$0xff]
      %v330 = vld [vmem:[#allocation2 + $0x58] sm:$0x3]
      %v331 = vld [vmem:[#allocation2 + $0x60] sm:$0xff]
      %v332 = vld [vmem:[#allocation2 + $0x68] sm:$0xff]
      %v333 = vld [vmem:[#allocation2 + $0x70] sm:$0x3]
      %v334 = vld [vmem:[#allocation2 + $0x78] sm:$0xff]
      %v335 = vld [vmem:[#allocation2 + $0x80] sm:$0xff]
      %v336 = vld [vmem:[#allocation2 + $0x88] sm:$0x3]
      %v337 = vld [vmem:[#allocation2 + $0x90] sm:$0xff]
      %v338 = vld [vmem:[#allocation2 + $0x98] sm:$0xff]
      %v339 = vld [vmem:[#allocation2 + $0xa0] sm:$0x3]
      %v340 = vld [vmem:[#allocation2 + $0xa8] sm:$0xff]
      %v341 = vld [vmem:[#allocation2 + $0xb0] sm:$0xff]
      %v342 = vld [vmem:[#allocation2 + $0xb8] sm:$0x3]
      %v343 = vld [vmem:[#allocation2 + $0xc0] sm:$0xff]
      %v344 = vld [vmem:[#allocation2 + $0xc8] sm:$0xff]
      %v345 = vld [vmem:[#allocation2 + $0xd0] sm:$0x3]
      %v346 = vld [vmem:[#allocation2 + $0xd8] sm:$0xff]
      %v347 = vld [vmem:[#allocation2 + $0xe0] sm:$0xff]
      %v348 = vld [vmem:[#allocation2 + $0xe8] sm:$0x3]
      %v349 = vld [vmem:[#allocation2 + $0xf0] sm:$0xff]
      %v350 = vld [vmem:[#allocation2 + $0xf8] sm:$0xff]
      %v351 = vld [vmem:[#allocation2 + $0x100] sm:$0x3]
      %v352 = vld [vmem:[#allocation2 + $0x108] sm:$0xff]
      %v353 = vld [vmem:[#allocation2 + $0x110] sm:$0xff]
      %v354 = vld [vmem:[#allocation2 + $0x118] sm:$0x3]
      %v355 = vld [vmem:[#allocation2 + $0x120] sm:$0xff]
      %v356 = vld [vmem:[#allocation2 + $0x128] sm:$0xff]
      %v357 = vld [vmem:[#allocation2 + $0x130] sm:$0x3]
      %v358 = vld [vmem:[#allocation2 + $0x138] sm:$0xff]
      %v359 = vld [vmem:[#allocation2 + $0x140] sm:$0xff]
      %v360 = vld [vmem:[#allocation2 + $0x148] sm:$0x3]
      %v361 = vld [vmem:[#allocation2 + $0x150] sm:$0xff]
      %v362 = vld [vmem:[#allocation2 + $0x158] sm:$0xff]
      %v363 = vld [vmem:[#allocation2 + $0x160] sm:$0x3]
      %v364 = vld [vmem:[#allocation2 + $0x168] sm:$0xff]
      %v365 = vld [vmem:[#allocation2 + $0x170] sm:$0xff]
      %v366 = vld [vmem:[#allocation2 + $0x178] sm:$0x3]
      %v367 = vld [vmem:[#allocation2 + $0x180] sm:$0xff]
      %v368 = vld [vmem:[#allocation2 + $0x188] sm:$0xff]
      %v369 = vld [vmem:[#allocation2 + $0x190] sm:$0x3]
      %v370 = vld [vmem:[#allocation2 + $0x198] sm:$0xff]
      %v371 = vld [vmem:[#allocation2 + $0x1a0] sm:$0xff]
      %v372 = vld [vmem:[#allocation2 + $0x1a8] sm:$0x3]
      %vm421 = vcmask 1046528
      %v422 = vrot.slane %v319, 1
      %v423 = vrot.slane %v320, 1
      %v424 = vsel %vm421, %v422, %v423
      %v425 = vrot.slane %v321, 1
      %v426 = vsel %vm421, %v423, %v425
      %v427 = vrot.slane %v322, 1
      %v428 = vrot.slane %v323, 1
      %v429 = vsel %vm421, %v427, %v428
      %v430 = vrot.slane %v324, 1
      %v431 = vsel %vm421, %v428, %v430
      %v432 = vrot.slane %v325, 1
      %v433 = vrot.slane %v326, 1
      %v434 = vsel %vm421, %v432, %v433
      %v435 = vrot.slane %v327, 1
      %v436 = vsel %vm421, %v433, %v435
      %v437 = vrot.slane %v328, 1
      %v438 = vrot.slane %v329, 1
      %v439 = vsel %vm421, %v437, %v438
      %v440 = vrot.slane %v330, 1
      %v441 = vsel %vm421, %v438, %v440
      %v442 = vrot.slane %v331, 1
      %v443 = vrot.slane %v332, 1
      %v444 = vsel %vm421, %v442, %v443
      %v445 = vrot.slane %v333, 1
      %v446 = vsel %vm421, %v443, %v445
      %v447 = vrot.slane %v334, 1
      %v448 = vrot.slane %v335, 1
      %v449 = vsel %vm421, %v447, %v448
      %v450 = vrot.slane %v336, 1
      %v451 = vsel %vm421, %v448, %v450
      %v452 = vrot.slane %v337, 1
      %v453 = vrot.slane %v338, 1
      %v454 = vsel %vm421, %v452, %v453
      %v455 = vrot.slane %v339, 1
      %v456 = vsel %vm421, %v453, %v455
      %v457 = vrot.slane %v340, 1
      %v458 = vrot.slane %v341, 1
      %v459 = vsel %vm421, %v457, %v458
      %v460 = vrot.slane %v342, 1
      %v461 = vsel %vm421, %v458, %v460
      %v462 = vrot.slane %v343, 1
      %v463 = vrot.slane %v344, 1
      %v464 = vsel %vm421, %v462, %v463
      %v465 = vrot.slane %v345, 1
      %v466 = vsel %vm421, %v463, %v465
      %v467 = vrot.slane %v346, 1
      %v468 = vrot.slane %v347, 1
      %v469 = vsel %vm421, %v467, %v468
      %v470 = vrot.slane %v348, 1
      %v471 = vsel %vm421, %v468, %v470
      %v472 = vrot.slane %v349, 1
      %v473 = vrot.slane %v350, 1
      %v474 = vsel %vm421, %v472, %v473
      %v475 = vrot.slane %v351, 1
      %v476 = vsel %vm421, %v473, %v475
      %v477 = vrot.slane %v352, 1
      %v478 = vrot.slane %v353, 1
      %v479 = vsel %vm421, %v477, %v478
      %v480 = vrot.slane %v354, 1
      %v481 = vsel %vm421, %v478, %v480
      %v482 = vrot.slane %v355, 1
      %v483 = vrot.slane %v356, 1
      %v484 = vsel %vm421, %v482, %v483
      %v485 = vrot.slane %v357, 1
      %v486 = vsel %vm421, %v483, %v485
      %v487 = vrot.slane %v358, 1
      %v488 = vrot.slane %v359, 1
      %v489 = vsel %vm421, %v487, %v488
      %v490 = vrot.slane %v360, 1
      %v491 = vsel %vm421, %v488, %v490
      %v492 = vrot.slane %v361, 1
      %v493 = vrot.slane %v362, 1
      %v494 = vsel %vm421, %v492, %v493
      %v495 = vrot.slane %v363, 1
      %v496 = vsel %vm421, %v493, %v495
      %v497 = vrot.slane %v364, 1
      %v498 = vrot.slane %v365, 1
      %v499 = vsel %vm421, %v497, %v498
      %v500 = vrot.slane %v366, 1
      %v501 = vsel %vm421, %v498, %v500
      %vm502 = vcmask 1045504
      %v503 = vrot.slane %v319, 2
      %v504 = vrot.slane %v320, 2
      %v505 = vsel %vm502, %v503, %v504
      %v506 = vrot.slane %v321, 2
      %v507 = vsel %vm502, %v504, %v506
      %v508 = vrot.slane %v322, 2
      %v509 = vrot.slane %v323, 2
      %v510 = vsel %vm502, %v508, %v509
      %v511 = vrot.slane %v324, 2
      %v512 = vsel %vm502, %v509, %v511
      %v513 = vrot.slane %v325, 2
      %v514 = vrot.slane %v326, 2
      %v515 = vsel %vm502, %v513, %v514
      %v516 = vrot.slane %v327, 2
      %v517 = vsel %vm502, %v514, %v516
      %v518 = vrot.slane %v328, 2
      %v519 = vrot.slane %v329, 2
      %v520 = vsel %vm502, %v518, %v519
      %v521 = vrot.slane %v330, 2
      %v522 = vsel %vm502, %v519, %v521
      %v523 = vrot.slane %v331, 2
      %v524 = vrot.slane %v332, 2
      %v525 = vsel %vm502, %v523, %v524
      %v526 = vrot.slane %v333, 2
      %v527 = vsel %vm502, %v524, %v526
      %v528 = vrot.slane %v334, 2
      %v529 = vrot.slane %v335, 2
      %v530 = vsel %vm502, %v528, %v529
      %v531 = vrot.slane %v336, 2
      %v532 = vsel %vm502, %v529, %v531
      %v533 = vrot.slane %v337, 2
      %v534 = vrot.slane %v338, 2
      %v535 = vsel %vm502, %v533, %v534
      %v536 = vrot.slane %v339, 2
      %v537 = vsel %vm502, %v534, %v536
      %v538 = vrot.slane %v340, 2
      %v539 = vrot.slane %v341, 2
      %v540 = vsel %vm502, %v538, %v539
      %v541 = vrot.slane %v342, 2
      %v542 = vsel %vm502, %v539, %v541
      %v543 = vrot.slane %v343, 2
      %v544 = vrot.slane %v344, 2
      %v545 = vsel %vm502, %v543, %v544
      %v546 = vrot.slane %v345, 2
      %v547 = vsel %vm502, %v544, %v546
      %v548 = vrot.slane %v346, 2
      %v549 = vrot.slane %v347, 2
      %v550 = vsel %vm502, %v548, %v549
      %v551 = vrot.slane %v348, 2
      %v552 = vsel %vm502, %v549, %v551
      %v553 = vrot.slane %v349, 2
      %v554 = vrot.slane %v350, 2
      %v555 = vsel %vm502, %v553, %v554
      %v556 = vrot.slane %v351, 2
      %v557 = vsel %vm502, %v554, %v556
      %v558 = vrot.slane %v352, 2
      %v559 = vrot.slane %v353, 2
      %v560 = vsel %vm502, %v558, %v559
      %v561 = vrot.slane %v354, 2
      %v562 = vsel %vm502, %v559, %v561
      %v563 = vrot.slane %v355, 2
      %v564 = vrot.slane %v356, 2
      %v565 = vsel %vm502, %v563, %v564
      %v566 = vrot.slane %v357, 2
      %v567 = vsel %vm502, %v564, %v566
      %v568 = vrot.slane %v358, 2
      %v569 = vrot.slane %v359, 2
      %v570 = vsel %vm502, %v568, %v569
      %v571 = vrot.slane %v360, 2
      %v572 = vsel %vm502, %v569, %v571
      %v573 = vrot.slane %v361, 2
      %v574 = vrot.slane %v362, 2
      %v575 = vsel %vm502, %v573, %v574
      %v576 = vrot.slane %v363, 2
      %v577 = vsel %vm502, %v574, %v576
      %v578 = vrot.slane %v364, 2
      %v579 = vrot.slane %v365, 2
      %v580 = vsel %vm502, %v578, %v579
      %v581 = vrot.slane %v366, 2
      %v582 = vsel %vm502, %v579, %v581
      %v586 = vrot.slane %v367, 1
      %v587 = vrot.slane %v368, 1
      %v588 = vsel %vm421, %v586, %v587
      %v589 = vrot.slane %v369, 1
      %v590 = vsel %vm421, %v587, %v589
      %v623 = vrot.slane %v367, 2
      %v624 = vrot.slane %v368, 2
      %v625 = vsel %vm502, %v623, %v624
      %v626 = vrot.slane %v369, 2
      %v627 = vsel %vm502, %v624, %v626
      %v631 = vrot.slane %v370, 1
      %v632 = vrot.slane %v371, 1
      %v633 = vsel %vm421, %v631, %v632
      %v634 = vrot.slane %v372, 1
      %v635 = vsel %vm421, %v632, %v634
      %v636 = vrot.slane %v370, 2
      %v637 = vrot.slane %v371, 2
      %v638 = vsel %vm502, %v636, %v637
      %v639 = vrot.slane %v372, 2
      %v640 = vsel %vm502, %v637, %v639
      %641 = vrot.lane.b32.xlu0 %v424, 32
      %v642 = vpop.permute.xlu0 %641
      %643 = vrot.lane.b32.xlu0 %v426, 32
      %v644 = vpop.permute.xlu0 %643
      %645 = vrot.lane.b32.xlu0 %v429, 32
      %v646 = vpop.permute.xlu0 %645
      %647 = vrot.lane.b32.xlu0 %v431, 32
      %v648 = vpop.permute.xlu0 %647
      %649 = vrot.lane.b32.xlu0 %v434, 32
      %v650 = vpop.permute.xlu0 %649
      %651 = vrot.lane.b32.xlu0 %v436, 32
      %v652 = vpop.permute.xlu0 %651
      %653 = vrot.lane.b32.xlu0 %v439, 32
      %v654 = vpop.permute.xlu0 %653
      %655 = vrot.lane.b32.xlu0 %v441, 32
      %v656 = vpop.permute.xlu0 %655
      %657 = vrot.lane.b32.xlu0 %v444, 32
      %v658 = vpop.permute.xlu0 %657
      %659 = vrot.lane.b32.xlu0 %v446, 32
      %v660 = vpop.permute.xlu0 %659
      %661 = vrot.lane.b32.xlu0 %v449, 32
      %v662 = vpop.permute.xlu0 %661
      %663 = vrot.lane.b32.xlu0 %v451, 32
      %v664 = vpop.permute.xlu0 %663
      %665 = vrot.lane.b32.xlu0 %v454, 32
      %v666 = vpop.permute.xlu0 %665
      %667 = vrot.lane.b32.xlu0 %v456, 32
      %v668 = vpop.permute.xlu0 %667
      %669 = vrot.lane.b32.xlu0 %v459, 32
      %v670 = vpop.permute.xlu0 %669
      %671 = vrot.lane.b32.xlu0 %v461, 32
      %v672 = vpop.permute.xlu0 %671
      %673 = vrot.lane.b32.xlu0 %v464, 32
      %v674 = vpop.permute.xlu0 %673
      %675 = vrot.lane.b32.xlu0 %v466, 32
      %v676 = vpop.permute.xlu0 %675
      %677 = vrot.lane.b32.xlu0 %v469, 32
      %v678 = vpop.permute.xlu0 %677
      %679 = vrot.lane.b32.xlu0 %v471, 32
      %v680 = vpop.permute.xlu0 %679
      %681 = vrot.lane.b32.xlu0 %v474, 32
      %v682 = vpop.permute.xlu0 %681
      %683 = vrot.lane.b32.xlu0 %v476, 32
      %v684 = vpop.permute.xlu0 %683
      %685 = vrot.lane.b32.xlu0 %v479, 32
      %v686 = vpop.permute.xlu0 %685
      %687 = vrot.lane.b32.xlu0 %v481, 32
      %v688 = vpop.permute.xlu0 %687
      %689 = vrot.lane.b32.xlu0 %v484, 32
      %v690 = vpop.permute.xlu0 %689
      %691 = vrot.lane.b32.xlu0 %v486, 32
      %v692 = vpop.permute.xlu0 %691
      %693 = vrot.lane.b32.xlu0 %v489, 32
      %v694 = vpop.permute.xlu0 %693
      %695 = vrot.lane.b32.xlu0 %v491, 32
      %v696 = vpop.permute.xlu0 %695
      %697 = vrot.lane.b32.xlu0 %v494, 32
      %v698 = vpop.permute.xlu0 %697
      %699 = vrot.lane.b32.xlu0 %v496, 32
      %v700 = vpop.permute.xlu0 %699
      %701 = vrot.lane.b32.xlu0 %v499, 32
      %v702 = vpop.permute.xlu0 %701
      %703 = vrot.lane.b32.xlu0 %v501, 32
      %v704 = vpop.permute.xlu0 %703
      %737 = vrot.lane.b32.xlu0 %v505, 64
      %v738 = vpop.permute.xlu0 %737
      %739 = vrot.lane.b32.xlu0 %v507, 64
      %v740 = vpop.permute.xlu0 %739
      %741 = vrot.lane.b32.xlu0 %v510, 64
      %v742 = vpop.permute.xlu0 %741
      %743 = vrot.lane.b32.xlu0 %v512, 64
      %v744 = vpop.permute.xlu0 %743
      %745 = vrot.lane.b32.xlu0 %v515, 64
      %v746 = vpop.permute.xlu0 %745
      %747 = vrot.lane.b32.xlu0 %v517, 64
      %v748 = vpop.permute.xlu0 %747
      %749 = vrot.lane.b32.xlu0 %v520, 64
      %v750 = vpop.permute.xlu0 %749
      %751 = vrot.lane.b32.xlu0 %v522, 64
      %v752 = vpop.permute.xlu0 %751
      %753 = vrot.lane.b32.xlu0 %v525, 64
      %v754 = vpop.permute.xlu0 %753
      %755 = vrot.lane.b32.xlu0 %v527, 64
      %v756 = vpop.permute.xlu0 %755
      %757 = vrot.lane.b32.xlu0 %v530, 64
      %v758 = vpop.permute.xlu0 %757
      %759 = vrot.lane.b32.xlu0 %v532, 64
      %v760 = vpop.permute.xlu0 %759
      %761 = vrot.lane.b32.xlu0 %v535, 64
      %v762 = vpop.permute.xlu0 %761
      %763 = vrot.lane.b32.xlu0 %v537, 64
      %v764 = vpop.permute.xlu0 %763
      %765 = vrot.lane.b32.xlu0 %v540, 64
      %v766 = vpop.permute.xlu0 %765
      %767 = vrot.lane.b32.xlu0 %v542, 64
      %v768 = vpop.permute.xlu0 %767
      %769 = vrot.lane.b32.xlu0 %v545, 64
      %v770 = vpop.permute.xlu0 %769
      %771 = vrot.lane.b32.xlu0 %v547, 64
      %v772 = vpop.permute.xlu0 %771
      %773 = vrot.lane.b32.xlu0 %v550, 64
      %v774 = vpop.permute.xlu0 %773
      %775 = vrot.lane.b32.xlu0 %v552, 64
      %v776 = vpop.permute.xlu0 %775
      %777 = vrot.lane.b32.xlu0 %v555, 64
      %v778 = vpop.permute.xlu0 %777
      %779 = vrot.lane.b32.xlu0 %v557, 64
      %v780 = vpop.permute.xlu0 %779
      %781 = vrot.lane.b32.xlu0 %v560, 64
      %v782 = vpop.permute.xlu0 %781
      %783 = vrot.lane.b32.xlu0 %v562, 64
      %v784 = vpop.permute.xlu0 %783
      %785 = vrot.lane.b32.xlu0 %v565, 64
      %v786 = vpop.permute.xlu0 %785
      %787 = vrot.lane.b32.xlu0 %v567, 64
      %v788 = vpop.permute.xlu0 %787
      %789 = vrot.lane.b32.xlu0 %v570, 64
      %v790 = vpop.permute.xlu0 %789
      %791 = vrot.lane.b32.xlu0 %v572, 64
      %v792 = vpop.permute.xlu0 %791
      %793 = vrot.lane.b32.xlu0 %v575, 64
      %v794 = vpop.permute.xlu0 %793
      %795 = vrot.lane.b32.xlu0 %v577, 64
      %v796 = vpop.permute.xlu0 %795
      %797 = vrot.lane.b32.xlu0 %v580, 64
      %v798 = vpop.permute.xlu0 %797
      %799 = vrot.lane.b32.xlu0 %v582, 64
      %v800 = vpop.permute.xlu0 %799
      %833 = vrot.lane.b32.xlu0 %v322, 96
      %v834 = vpop.permute.xlu0 %833
      %835 = vrot.lane.b32.xlu0 %v323, 96
      %v836 = vpop.permute.xlu0 %835
      %837 = vrot.lane.b32.xlu0 %v325, 96
      %v838 = vpop.permute.xlu0 %837
      %839 = vrot.lane.b32.xlu0 %v326, 96
      %v840 = vpop.permute.xlu0 %839
      %841 = vrot.lane.b32.xlu0 %v328, 96
      %v842 = vpop.permute.xlu0 %841
      %843 = vrot.lane.b32.xlu0 %v329, 96
      %v844 = vpop.permute.xlu0 %843
      %845 = vrot.lane.b32.xlu0 %v331, 96
      %v846 = vpop.permute.xlu0 %845
      %847 = vrot.lane.b32.xlu0 %v332, 96
      %v848 = vpop.permute.xlu0 %847
      %849 = vrot.lane.b32.xlu0 %v334, 96
      %v850 = vpop.permute.xlu0 %849
      %851 = vrot.lane.b32.xlu0 %v335, 96
      %v852 = vpop.permute.xlu0 %851
      %853 = vrot.lane.b32.xlu0 %v337, 96
      %v854 = vpop.permute.xlu0 %853
      %855 = vrot.lane.b32.xlu0 %v338, 96
      %v856 = vpop.permute.xlu0 %855
      %857 = vrot.lane.b32.xlu0 %v340, 96
      %v858 = vpop.permute.xlu0 %857
      %859 = vrot.lane.b32.xlu0 %v341, 96
      %v860 = vpop.permute.xlu0 %859
      %861 = vrot.lane.b32.xlu0 %v343, 96
      %v862 = vpop.permute.xlu0 %861
      %863 = vrot.lane.b32.xlu0 %v344, 96
      %v864 = vpop.permute.xlu0 %863
      %865 = vrot.lane.b32.xlu0 %v346, 96
      %v866 = vpop.permute.xlu0 %865
      %867 = vrot.lane.b32.xlu0 %v347, 96
      %v868 = vpop.permute.xlu0 %867
      %869 = vrot.lane.b32.xlu0 %v349, 96
      %v870 = vpop.permute.xlu0 %869
      %871 = vrot.lane.b32.xlu0 %v350, 96
      %v872 = vpop.permute.xlu0 %871
      %873 = vrot.lane.b32.xlu0 %v352, 96
      %v874 = vpop.permute.xlu0 %873
      %875 = vrot.lane.b32.xlu0 %v353, 96
      %v876 = vpop.permute.xlu0 %875
      %877 = vrot.lane.b32.xlu0 %v355, 96
      %v878 = vpop.permute.xlu0 %877
      %879 = vrot.lane.b32.xlu0 %v356, 96
      %v880 = vpop.permute.xlu0 %879
      %881 = vrot.lane.b32.xlu0 %v358, 96
      %v882 = vpop.permute.xlu0 %881
      %883 = vrot.lane.b32.xlu0 %v359, 96
      %v884 = vpop.permute.xlu0 %883
      %885 = vrot.lane.b32.xlu0 %v361, 96
      %v886 = vpop.permute.xlu0 %885
      %887 = vrot.lane.b32.xlu0 %v362, 96
      %v888 = vpop.permute.xlu0 %887
      %889 = vrot.lane.b32.xlu0 %v364, 96
      %v890 = vpop.permute.xlu0 %889
      %891 = vrot.lane.b32.xlu0 %v365, 96
      %v892 = vpop.permute.xlu0 %891
      %893 = vrot.lane.b32.xlu0 %v367, 96
      %v894 = vpop.permute.xlu0 %893
      %895 = vrot.lane.b32.xlu0 %v368, 96
      %v896 = vpop.permute.xlu0 %895
      %929 = vrot.lane.b32.xlu0 %v510, 32
      %v930 = vpop.permute.xlu0 %929
      %931 = vrot.lane.b32.xlu0 %v512, 32
      %v932 = vpop.permute.xlu0 %931
      %933 = vrot.lane.b32.xlu0 %v515, 32
      %v934 = vpop.permute.xlu0 %933
      %935 = vrot.lane.b32.xlu0 %v517, 32
      %v936 = vpop.permute.xlu0 %935
      %937 = vrot.lane.b32.xlu0 %v520, 32
      %v938 = vpop.permute.xlu0 %937
      %939 = vrot.lane.b32.xlu0 %v522, 32
      %v940 = vpop.permute.xlu0 %939
      %941 = vrot.lane.b32.xlu0 %v525, 32
      %v942 = vpop.permute.xlu0 %941
      %943 = vrot.lane.b32.xlu0 %v527, 32
      %v944 = vpop.permute.xlu0 %943
      %945 = vrot.lane.b32.xlu0 %v530, 32
      %v946 = vpop.permute.xlu0 %945
      %947 = vrot.lane.b32.xlu0 %v532, 32
      %v948 = vpop.permute.xlu0 %947
      %949 = vrot.lane.b32.xlu0 %v535, 32
      %v950 = vpop.permute.xlu0 %949
      %951 = vrot.lane.b32.xlu0 %v537, 32
      %v952 = vpop.permute.xlu0 %951
      %953 = vrot.lane.b32.xlu0 %v540, 32
      %v954 = vpop.permute.xlu0 %953
      %955 = vrot.lane.b32.xlu0 %v542, 32
      %v956 = vpop.permute.xlu0 %955
      %957 = vrot.lane.b32.xlu0 %v545, 32
      %v958 = vpop.permute.xlu0 %957
      %959 = vrot.lane.b32.xlu0 %v547, 32
      %v960 = vpop.permute.xlu0 %959
      %961 = vrot.lane.b32.xlu0 %v550, 32
      %v962 = vpop.permute.xlu0 %961
      %963 = vrot.lane.b32.xlu0 %v552, 32
      %v964 = vpop.permute.xlu0 %963
      %965 = vrot.lane.b32.xlu0 %v555, 32
      %v966 = vpop.permute.xlu0 %965
      %967 = vrot.lane.b32.xlu0 %v557, 32
      %v968 = vpop.permute.xlu0 %967
      %969 = vrot.lane.b32.xlu0 %v560, 32
      %v970 = vpop.permute.xlu0 %969
      %971 = vrot.lane.b32.xlu0 %v562, 32
      %v972 = vpop.permute.xlu0 %971
      %973 = vrot.lane.b32.xlu0 %v565, 32
      %v974 = vpop.permute.xlu0 %973
      %975 = vrot.lane.b32.xlu0 %v567, 32
      %v976 = vpop.permute.xlu0 %975
      %977 = vrot.lane.b32.xlu0 %v570, 32
      %v978 = vpop.permute.xlu0 %977
      %979 = vrot.lane.b32.xlu0 %v572, 32
      %v980 = vpop.permute.xlu0 %979
      %981 = vrot.lane.b32.xlu0 %v575, 32
      %v982 = vpop.permute.xlu0 %981
      %983 = vrot.lane.b32.xlu0 %v577, 32
      %v984 = vpop.permute.xlu0 %983
      %985 = vrot.lane.b32.xlu0 %v580, 32
      %v986 = vpop.permute.xlu0 %985
      %987 = vrot.lane.b32.xlu0 %v582, 32
      %v988 = vpop.permute.xlu0 %987
      %989 = vrot.lane.b32.xlu0 %v625, 32
      %v990 = vpop.permute.xlu0 %989
      %991 = vrot.lane.b32.xlu0 %v627, 32
      %v992 = vpop.permute.xlu0 %991
      %1025 = vrot.lane.b32.xlu0 %v325, 64
      %v1026 = vpop.permute.xlu0 %1025
      %1027 = vrot.lane.b32.xlu0 %v326, 64
      %v1028 = vpop.permute.xlu0 %1027
      %1029 = vrot.lane.b32.xlu0 %v328, 64
      %v1030 = vpop.permute.xlu0 %1029
      %1031 = vrot.lane.b32.xlu0 %v329, 64
      %v1032 = vpop.permute.xlu0 %1031
      %1033 = vrot.lane.b32.xlu0 %v331, 64
      %v1034 = vpop.permute.xlu0 %1033
      %1035 = vrot.lane.b32.xlu0 %v332, 64
      %v1036 = vpop.permute.xlu0 %1035
      %1037 = vrot.lane.b32.xlu0 %v334, 64
      %v1038 = vpop.permute.xlu0 %1037
      %1039 = vrot.lane.b32.xlu0 %v335, 64
      %v1040 = vpop.permute.xlu0 %1039
      %1041 = vrot.lane.b32.xlu0 %v337, 64
      %v1042 = vpop.permute.xlu0 %1041
      %1043 = vrot.lane.b32.xlu0 %v338, 64
      %v1044 = vpop.permute.xlu0 %1043
      %1045 = vrot.lane.b32.xlu0 %v340, 64
      %v1046 = vpop.permute.xlu0 %1045
      %1047 = vrot.lane.b32.xlu0 %v341, 64
      %v1048 = vpop.permute.xlu0 %1047
      %1049 = vrot.lane.b32.xlu0 %v343, 64
      %v1050 = vpop.permute.xlu0 %1049
      %1051 = vrot.lane.b32.xlu0 %v344, 64
      %v1052 = vpop.permute.xlu0 %1051
      %1053 = vrot.lane.b32.xlu0 %v346, 64
      %v1054 = vpop.permute.xlu0 %1053
      %1055 = vrot.lane.b32.xlu0 %v347, 64
      %v1056 = vpop.permute.xlu0 %1055
      %1057 = vrot.lane.b32.xlu0 %v349, 64
      %v1058 = vpop.permute.xlu0 %1057
      %1059 = vrot.lane.b32.xlu0 %v350, 64
      %v1060 = vpop.permute.xlu0 %1059
      %1061 = vrot.lane.b32.xlu0 %v352, 64
      %v1062 = vpop.permute.xlu0 %1061
      %1063 = vrot.lane.b32.xlu0 %v353, 64
      %v1064 = vpop.permute.xlu0 %1063
      %1065 = vrot.lane.b32.xlu0 %v355, 64
      %v1066 = vpop.permute.xlu0 %1065
      %1067 = vrot.lane.b32.xlu0 %v356, 64
      %v1068 = vpop.permute.xlu0 %1067
      %1069 = vrot.lane.b32.xlu0 %v358, 64
      %v1070 = vpop.permute.xlu0 %1069
      %1071 = vrot.lane.b32.xlu0 %v359, 64
      %v1072 = vpop.permute.xlu0 %1071
      %1073 = vrot.lane.b32.xlu0 %v361, 64
      %v1074 = vpop.permute.xlu0 %1073
      %1075 = vrot.lane.b32.xlu0 %v362, 64
      %v1076 = vpop.permute.xlu0 %1075
      %1077 = vrot.lane.b32.xlu0 %v364, 64
      %v1078 = vpop.permute.xlu0 %1077
      %1079 = vrot.lane.b32.xlu0 %v365, 64
      %v1080 = vpop.permute.xlu0 %1079
      %1081 = vrot.lane.b32.xlu0 %v367, 64
      %v1082 = vpop.permute.xlu0 %1081
      %1083 = vrot.lane.b32.xlu0 %v368, 64
      %v1084 = vpop.permute.xlu0 %1083
      %1085 = vrot.lane.b32.xlu0 %v370, 64
      %v1086 = vpop.permute.xlu0 %1085
      %1087 = vrot.lane.b32.xlu0 %v371, 64
      %v1088 = vpop.permute.xlu0 %1087
      %1121 = vrot.lane.b32.xlu0 %v434, 96
      %v1122 = vpop.permute.xlu0 %1121
      %1123 = vrot.lane.b32.xlu0 %v436, 96
      %v1124 = vpop.permute.xlu0 %1123
      %1125 = vrot.lane.b32.xlu0 %v439, 96
      %v1126 = vpop.permute.xlu0 %1125
      %1127 = vrot.lane.b32.xlu0 %v441, 96
      %v1128 = vpop.permute.xlu0 %1127
      %1129 = vrot.lane.b32.xlu0 %v444, 96
      %v1130 = vpop.permute.xlu0 %1129
      %1131 = vrot.lane.b32.xlu0 %v446, 96
      %v1132 = vpop.permute.xlu0 %1131
      %1133 = vrot.lane.b32.xlu0 %v449, 96
      %v1134 = vpop.permute.xlu0 %1133
      %1135 = vrot.lane.b32.xlu0 %v451, 96
      %v1136 = vpop.permute.xlu0 %1135
      %1137 = vrot.lane.b32.xlu0 %v454, 96
      %v1138 = vpop.permute.xlu0 %1137
      %1139 = vrot.lane.b32.xlu0 %v456, 96
      %v1140 = vpop.permute.xlu0 %1139
      %1141 = vrot.lane.b32.xlu0 %v459, 96
      %v1142 = vpop.permute.xlu0 %1141
      %1143 = vrot.lane.b32.xlu0 %v461, 96
      %v1144 = vpop.permute.xlu0 %1143
      %1145 = vrot.lane.b32.xlu0 %v464, 96
      %v1146 = vpop.permute.xlu0 %1145
      %1147 = vrot.lane.b32.xlu0 %v466, 96
      %v1148 = vpop.permute.xlu0 %1147
      %1149 = vrot.lane.b32.xlu0 %v469, 96
      %v1150 = vpop.permute.xlu0 %1149
      %1151 = vrot.lane.b32.xlu0 %v471, 96
      %v1152 = vpop.permute.xlu0 %1151
      %1153 = vrot.lane.b32.xlu0 %v474, 96
      %v1154 = vpop.permute.xlu0 %1153
      %1155 = vrot.lane.b32.xlu0 %v476, 96
      %v1156 = vpop.permute.xlu0 %1155
      %1157 = vrot.lane.b32.xlu0 %v479, 96
      %v1158 = vpop.permute.xlu0 %1157
      %1159 = vrot.lane.b32.xlu0 %v481, 96
      %v1160 = vpop.permute.xlu0 %1159
      %1161 = vrot.lane.b32.xlu0 %v484, 96
      %v1162 = vpop.permute.xlu0 %1161
      %1163 = vrot.lane.b32.xlu0 %v486, 96
      %v1164 = vpop.permute.xlu0 %1163
      %1165 = vrot.lane.b32.xlu0 %v489, 96
      %v1166 = vpop.permute.xlu0 %1165
      %1167 = vrot.lane.b32.xlu0 %v491, 96
      %v1168 = vpop.permute.xlu0 %1167
      %1169 = vrot.lane.b32.xlu0 %v494, 96
      %v1170 = vpop.permute.xlu0 %1169
      %1171 = vrot.lane.b32.xlu0 %v496, 96
      %v1172 = vpop.permute.xlu0 %1171
      %1173 = vrot.lane.b32.xlu0 %v499, 96
      %v1174 = vpop.permute.xlu0 %1173
      %1175 = vrot.lane.b32.xlu0 %v501, 96
      %v1176 = vpop.permute.xlu0 %1175
      %1177 = vrot.lane.b32.xlu0 %v588, 96
      %v1178 = vpop.permute.xlu0 %1177
      %1179 = vrot.lane.b32.xlu0 %v590, 96
      %v1180 = vpop.permute.xlu0 %1179
      %1181 = vrot.lane.b32.xlu0 %v633, 96
      %v1182 = vpop.permute.xlu0 %1181
      %1183 = vrot.lane.b32.xlu0 %v635, 96
      %v1184 = vpop.permute.xlu0 %1183
      %v1217 = vsel %vm230, %v319, %v642
      %v1218 = vsel %vm230, %v320, %v644
      %v1219 = vsel %vm230, %v322, %v646
      %v1220 = vsel %vm230, %v323, %v648
      %v1221 = vsel %vm230, %v325, %v650
      %v1222 = vsel %vm230, %v326, %v652
      %v1223 = vsel %vm230, %v328, %v654
      %v1224 = vsel %vm230, %v329, %v656
      %v1225 = vsel %vm230, %v331, %v658
      %v1226 = vsel %vm230, %v332, %v660
      %v1227 = vsel %vm230, %v334, %v662
      %v1228 = vsel %vm230, %v335, %v664
      %v1229 = vsel %vm230, %v337, %v666
      %v1230 = vsel %vm230, %v338, %v668
      %v1231 = vsel %vm230, %v340, %v670
      %v1232 = vsel %vm230, %v341, %v672
      %v1233 = vsel %vm230, %v343, %v674
      %v1234 = vsel %vm230, %v344, %v676
      %v1235 = vsel %vm230, %v346, %v678
      %v1236 = vsel %vm230, %v347, %v680
      %v1237 = vsel %vm230, %v349, %v682
      %v1238 = vsel %vm230, %v350, %v684
      %v1239 = vsel %vm230, %v352, %v686
      %v1240 = vsel %vm230, %v353, %v688
      %v1241 = vsel %vm230, %v355, %v690
      %v1242 = vsel %vm230, %v356, %v692
      %v1243 = vsel %vm230, %v358, %v694
      %v1244 = vsel %vm230, %v359, %v696
      %v1245 = vsel %vm230, %v361, %v698
      %v1246 = vsel %vm230, %v362, %v700
      %v1247 = vsel %vm230, %v364, %v702
      %v1248 = vsel %vm230, %v365, %v704
      %vm1249 = vcmask 523264
      %v1250 = vsel %vm1249, %v1217, %v738
      %v1251 = vsel %vm1249, %v1218, %v740
      %v1252 = vsel %vm1249, %v1219, %v742
      %v1253 = vsel %vm1249, %v1220, %v744
      %v1254 = vsel %vm1249, %v1221, %v746
      %v1255 = vsel %vm1249, %v1222, %v748
      %v1256 = vsel %vm1249, %v1223, %v750
      %v1257 = vsel %vm1249, %v1224, %v752
      %v1258 = vsel %vm1249, %v1225, %v754
      %v1259 = vsel %vm1249, %v1226, %v756
      %v1260 = vsel %vm1249, %v1227, %v758
      %v1261 = vsel %vm1249, %v1228, %v760
      %v1262 = vsel %vm1249, %v1229, %v762
      %v1263 = vsel %vm1249, %v1230, %v764
      %v1264 = vsel %vm1249, %v1231, %v766
      %v1265 = vsel %vm1249, %v1232, %v768
      %v1266 = vsel %vm1249, %v1233, %v770
      %v1267 = vsel %vm1249, %v1234, %v772
      %v1268 = vsel %vm1249, %v1235, %v774
      %v1269 = vsel %vm1249, %v1236, %v776
      %v1270 = vsel %vm1249, %v1237, %v778
      %v1271 = vsel %vm1249, %v1238, %v780
      %v1272 = vsel %vm1249, %v1239, %v782
      %v1273 = vsel %vm1249, %v1240, %v784
      %v1274 = vsel %vm1249, %v1241, %v786
      %v1275 = vsel %vm1249, %v1242, %v788
      %v1276 = vsel %vm1249, %v1243, %v790
      %v1277 = vsel %vm1249, %v1244, %v792
      %v1278 = vsel %vm1249, %v1245, %v794
      %v1279 = vsel %vm1249, %v1246, %v796
      %v1280 = vsel %vm1249, %v1247, %v798
      %v1281 = vsel %vm1249, %v1248, %v800
      %vm1282 = vcmask 785408
      %v1283 = vsel %vm1282, %v1250, %v834
      %v1284 = vsel %vm1282, %v1251, %v836
      %v1285 = vsel %vm1282, %v1252, %v838
      %v1286 = vsel %vm1282, %v1253, %v840
      %v1287 = vsel %vm1282, %v1254, %v842
      %v1288 = vsel %vm1282, %v1255, %v844
      %v1289 = vsel %vm1282, %v1256, %v846
      %v1290 = vsel %vm1282, %v1257, %v848
      %v1291 = vsel %vm1282, %v1258, %v850
      %v1292 = vsel %vm1282, %v1259, %v852
      %v1293 = vsel %vm1282, %v1260, %v854
      %v1294 = vsel %vm1282, %v1261, %v856
      %v1295 = vsel %vm1282, %v1262, %v858
      %v1296 = vsel %vm1282, %v1263, %v860
      %v1297 = vsel %vm1282, %v1264, %v862
      %v1298 = vsel %vm1282, %v1265, %v864
      %v1299 = vsel %vm1282, %v1266, %v866
      %v1300 = vsel %vm1282, %v1267, %v868
      %v1301 = vsel %vm1282, %v1268, %v870
      %v1302 = vsel %vm1282, %v1269, %v872
      %v1303 = vsel %vm1282, %v1270, %v874
      %v1304 = vsel %vm1282, %v1271, %v876
      %v1305 = vsel %vm1282, %v1272, %v878
      %v1306 = vsel %vm1282, %v1273, %v880
      %v1307 = vsel %vm1282, %v1274, %v882
      %v1308 = vsel %vm1282, %v1275, %v884
      %v1309 = vsel %vm1282, %v1276, %v886
      %v1310 = vsel %vm1282, %v1277, %v888
      %v1311 = vsel %vm1282, %v1278, %v890
      %v1312 = vsel %vm1282, %v1279, %v892
      %v1313 = vsel %vm1282, %v1280, %v894
      %v1314 = vsel %vm1282, %v1281, %v896
      %v1315 = vsel %vm230, %v429, %v930
      %v1316 = vsel %vm230, %v431, %v932
      %v1317 = vsel %vm230, %v434, %v934
      %v1318 = vsel %vm230, %v436, %v936
      %v1319 = vsel %vm230, %v439, %v938
      %v1320 = vsel %vm230, %v441, %v940
      %v1321 = vsel %vm230, %v444, %v942
      %v1322 = vsel %vm230, %v446, %v944
      %v1323 = vsel %vm230, %v449, %v946
      %v1324 = vsel %vm230, %v451, %v948
      %v1325 = vsel %vm230, %v454, %v950
      %v1326 = vsel %vm230, %v456, %v952
      %v1327 = vsel %vm230, %v459, %v954
      %v1328 = vsel %vm230, %v461, %v956
      %v1329 = vsel %vm230, %v464, %v958
      %v1330 = vsel %vm230, %v466, %v960
      %v1331 = vsel %vm230, %v469, %v962
      %v1332 = vsel %vm230, %v471, %v964
      %v1333 = vsel %vm230, %v474, %v966
      %v1334 = vsel %vm230, %v476, %v968
      %v1335 = vsel %vm230, %v479, %v970
      %v1336 = vsel %vm230, %v481, %v972
      %v1337 = vsel %vm230, %v484, %v974
      %v1338 = vsel %vm230, %v486, %v976
      %v1339 = vsel %vm230, %v489, %v978
      %v1340 = vsel %vm230, %v491, %v980
      %v1341 = vsel %vm230, %v494, %v982
      %v1342 = vsel %vm230, %v496, %v984
      %v1343 = vsel %vm230, %v499, %v986
      %v1344 = vsel %vm230, %v501, %v988
      %v1345 = vsel %vm230, %v588, %v990
      %v1346 = vsel %vm230, %v590, %v992
      %v1347 = vsel %vm1249, %v1315, %v1026
      %v1348 = vsel %vm1249, %v1316, %v1028
      %v1349 = vsel %vm1249, %v1317, %v1030
      %v1350 = vsel %vm1249, %v1318, %v1032
      %v1351 = vsel %vm1249, %v1319, %v1034
      %v1352 = vsel %vm1249, %v1320, %v1036
      %v1353 = vsel %vm1249, %v1321, %v1038
      %v1354 = vsel %vm1249, %v1322, %v1040
      %v1355 = vsel %vm1249, %v1323, %v1042
      %v1356 = vsel %vm1249, %v1324, %v1044
      %v1357 = vsel %vm1249, %v1325, %v1046
      %v1358 = vsel %vm1249, %v1326, %v1048
      %v1359 = vsel %vm1249, %v1327, %v1050
      %v1360 = vsel %vm1249, %v1328, %v1052
      %v1361 = vsel %vm1249, %v1329, %v1054
      %v1362 = vsel %vm1249, %v1330, %v1056
      %v1363 = vsel %vm1249, %v1331, %v1058
      %v1364 = vsel %vm1249, %v1332, %v1060
      %v1365 = vsel %vm1249, %v1333, %v1062
      %v1366 = vsel %vm1249, %v1334, %v1064
      %v1367 = vsel %vm1249, %v1335, %v1066
      %v1368 = vsel %vm1249, %v1336, %v1068
      %v1369 = vsel %vm1249, %v1337, %v1070
      %v1370 = vsel %vm1249, %v1338, %v1072
      %v1371 = vsel %vm1249, %v1339, %v1074
      %v1372 = vsel %vm1249, %v1340, %v1076
      %v1373 = vsel %vm1249, %v1341, %v1078
      %v1374 = vsel %vm1249, %v1342, %v1080
      %v1375 = vsel %vm1249, %v1343, %v1082
      %v1376 = vsel %vm1249, %v1344, %v1084
      %v1377 = vsel %vm1249, %v1345, %v1086
      %v1378 = vsel %vm1249, %v1346, %v1088
      %v1379 = vsel %vm1282, %v1347, %v1122
      %v1380 = vsel %vm1282, %v1348, %v1124
      %v1381 = vsel %vm1282, %v1349, %v1126
      %v1382 = vsel %vm1282, %v1350, %v1128
      %v1383 = vsel %vm1282, %v1351, %v1130
      %v1384 = vsel %vm1282, %v1352, %v1132
      %v1385 = vsel %vm1282, %v1353, %v1134
      %v1386 = vsel %vm1282, %v1354, %v1136
      %v1387 = vsel %vm1282, %v1355, %v1138
      %v1388 = vsel %vm1282, %v1356, %v1140
      %v1389 = vsel %vm1282, %v1357, %v1142
      %v1390 = vsel %vm1282, %v1358, %v1144
      %v1391 = vsel %vm1282, %v1359, %v1146
      %v1392 = vsel %vm1282, %v1360, %v1148
      %v1393 = vsel %vm1282, %v1361, %v1150
      %v1394 = vsel %vm1282, %v1362, %v1152
      %v1395 = vsel %vm1282, %v1363, %v1154
      %v1396 = vsel %vm1282, %v1364, %v1156
      %v1397 = vsel %vm1282, %v1365, %v1158
      %v1398 = vsel %vm1282, %v1366, %v1160
      %v1399 = vsel %vm1282, %v1367, %v1162
      %v1400 = vsel %vm1282, %v1368, %v1164
      %v1401 = vsel %vm1282, %v1369, %v1166
      %v1402 = vsel %vm1282, %v1370, %v1168
      %v1403 = vsel %vm1282, %v1371, %v1170
      %v1404 = vsel %vm1282, %v1372, %v1172
      %v1405 = vsel %vm1282, %v1373, %v1174
      %v1406 = vsel %vm1282, %v1374, %v1176
      %v1407 = vsel %vm1282, %v1375, %v1178
      %v1408 = vsel %vm1282, %v1376, %v1180
      %v1409 = vsel %vm1282, %v1377, %v1182
      %v1410 = vsel %vm1282, %v1378, %v1184
      %v1411 = vld [vmem:[%s1] sm:$0xff]
      %v1412 = vld [vmem:[%s1 + $0x8] sm:$0xff]
      %v1413 = vld [vmem:[%s1 + $0x10] sm:$0xff]
      %v1414 = vld [vmem:[%s1 + $0x18] sm:$0xff]
      %v1415 = vld [vmem:[%s1 + $0x20] sm:$0xff]
      %v1416 = vld [vmem:[%s1 + $0x28] sm:$0xff]
      %v1417 = vld [vmem:[%s1 + $0x30] sm:$0xff]
      %v1418 = vld [vmem:[%s1 + $0x38] sm:$0xff]
      %v1419 = vld [vmem:[%s1 + $0x40] sm:$0xff]
      %v1420 = vld [vmem:[%s1 + $0x48] sm:$0xff]
      %v1421 = vld [vmem:[%s1 + $0x50] sm:$0xff]
      %v1422 = vld [vmem:[%s1 + $0x58] sm:$0xff]
      %v1423 = vld [vmem:[%s1 + $0x60] sm:$0xff]
      %v1424 = vld [vmem:[%s1 + $0x68] sm:$0xff]
      %v1425 = vld [vmem:[%s1 + $0x70] sm:$0xff]
      %v1426 = vld [vmem:[%s1 + $0x78] sm:$0xff]
      %v1427 = vld [vmem:[%s1 + $0x80] sm:$0xff]
      %v1428 = vld [vmem:[%s1 + $0x88] sm:$0xff]
      %v1429 = vld [vmem:[%s1 + $0x90] sm:$0xff]
      %v1430 = vld [vmem:[%s1 + $0x98] sm:$0xff]
      %v1431 = vld [vmem:[%s1 + $0xa0] sm:$0xff]
      %v1432 = vld [vmem:[%s1 + $0xa8] sm:$0xff]
      %v1433 = vld [vmem:[%s1 + $0xb0] sm:$0xff]
      %v1434 = vld [vmem:[%s1 + $0xb8] sm:$0xff]
      %v1435 = vld [vmem:[%s1 + $0xc0] sm:$0xff]
      %v1436 = vld [vmem:[%s1 + $0xc8] sm:$0xff]
      %v1437 = vld [vmem:[%s1 + $0xd0] sm:$0xff]
      %v1438 = vld [vmem:[%s1 + $0xd8] sm:$0xff]
      %v1439 = vld [vmem:[%s1 + $0xe0] sm:$0xff]
      %v1440 = vld [vmem:[%s1 + $0xe8] sm:$0xff]
      %v1441 = vld [vmem:[%s1 + $0xf0] sm:$0xff]
      %v1442 = vld [vmem:[%s1 + $0xf8] sm:$0xff]
      %v1443 = vld [vmem:[%s1 + $0x100] sm:$0xff]
      %v1444 = vld [vmem:[%s1 + $0x108] sm:$0xff]
      %v1445 = vld [vmem:[%s1 + $0x110] sm:$0xff]
      %v1446 = vld [vmem:[%s1 + $0x118] sm:$0xff]
      %v1447 = vsel %vm230, %v515, 0
      %v1449 = vsel %vm230, %v517, 0
      %v1451 = vsel %vm230, %v520, 0
      %v1453 = vsel %vm230, %v522, 0
      %v1455 = vsel %vm230, %v525, 0
      %v1457 = vsel %vm230, %v527, 0
      %v1459 = vsel %vm230, %v530, 0
      %v1461 = vsel %vm230, %v532, 0
      %v1463 = vsel %vm230, %v535, 0
      %v1465 = vsel %vm230, %v537, 0
      %v1467 = vsel %vm230, %v540, 0
      %v1469 = vsel %vm230, %v542, 0
      %v1471 = vsel %vm230, %v545, 0
      %v1473 = vsel %vm230, %v547, 0
      %v1475 = vsel %vm230, %v550, 0
      %v1477 = vsel %vm230, %v552, 0
      %v1479 = vsel %vm230, %v555, 0
      %v1481 = vsel %vm230, %v557, 0
      %v1483 = vsel %vm230, %v560, 0
      %v1485 = vsel %vm230, %v562, 0
      %v1487 = vsel %vm230, %v565, 0
      %v1489 = vsel %vm230, %v567, 0
      %v1491 = vsel %vm230, %v570, 0
      %v1493 = vsel %vm230, %v572, 0
      %v1495 = vsel %vm230, %v575, 0
      %v1497 = vsel %vm230, %v577, 0
      %v1499 = vsel %vm230, %v580, 0
      %v1501 = vsel %vm230, %v582, 0
      %v1503 = vsel %vm230, %v625, 0
      %v1505 = vsel %vm230, %v627, 0
      %v1507 = vsel %vm230, %v638, 0
      %v1509 = vsel %vm230, %v640, 0
      %1511 = vmatprep.subr.mxu0 0.0
      %1512 = vmatpush1.msra.mxu0 %v1426
      %1513 = vmatprep.subr.mxu0 0.0
      %1514 = vmatpush1.msra.mxu0 %v1425
      %1515 = vmatprep.subr.mxu0 0.0
      %1516 = vmatpush1.msra.mxu0 %v1424
      %1517 = vmatprep.subr.mxu0 0.0
      %1518 = vmatpush1.msra.mxu0 %v1423
      %1519 = vmatprep.subr.mxu0 0.0
      %1520 = vmatpush1.msra.mxu0 %v1422
      %1521 = vmatprep.subr.mxu0 0.0
      %1522 = vmatpush1.msra.mxu0 %v1421
      %1523 = vmatprep.subr.mxu0 0.0
      %1524 = vmatpush1.msra.mxu0 %v1420
      %1525 = vmatprep.subr.mxu0 0.0
      %1526 = vmatpush1.msra.mxu0 %v1419
      %1527 = vmatprep.subr.mxu0 0.0
      %1528 = vmatpush1.msra.mxu0 %v1418
      %1529 = vmatprep.subr.mxu0 0.0
      %1530 = vmatpush1.msra.mxu0 %v1417
      %1531 = vmatprep.subr.mxu0 0.0
      %1532 = vmatpush1.msra.mxu0 %v1416
      %1533 = vmatprep.subr.mxu0 0.0
      %1534 = vmatpush1.msra.mxu0 %v1415
      %1535 = vmatprep.subr.mxu0 0.0
      %1536 = vmatpush1.msra.mxu0 %v1414
      %1537 = vmatprep.subr.mxu0 0.0
      %1538 = vmatpush1.msra.mxu0 %v1413
      %1539 = vmatprep.subr.mxu0 0.0
      %1540 = vmatpush1.msra.mxu0 %v1412
      %1541 = vmatprep.subr.mxu0 0.0
      %1542 = vmatpush1.msra.mxu0 %v1411
      %1543 = vmatprep.subr.mxu0 0.0
      %1544 = vmatpush2.msra.mxu0 %v1442
      %1545 = vmatprep.subr.mxu0 0.0
      %1546 = vmatpush2.msra.mxu0 %v1441
      %1547 = vmatprep.subr.mxu0 0.0
      %1548 = vmatpush2.msra.mxu0 %v1440
      %1549 = vmatprep.subr.mxu0 0.0
      %1550 = vmatpush2.msra.mxu0 %v1439
      %1551 = vmatprep.subr.mxu0 0.0
      %1552 = vmatpush2.msra.mxu0 %v1438
      %1553 = vmatprep.subr.mxu0 0.0
      %1554 = vmatpush2.msra.mxu0 %v1437
      %1555 = vmatprep.subr.mxu0 0.0
      %1556 = vmatpush2.msra.mxu0 %v1436
      %1557 = vmatprep.subr.mxu0 0.0
      %1558 = vmatpush2.msra.mxu0 %v1435
      %1559 = vmatprep.subr.mxu0 0.0
      %1560 = vmatpush2.msra.mxu0 %v1434
      %1561 = vmatprep.subr.mxu0 0.0
      %1562 = vmatpush2.msra.mxu0 %v1433
      %1563 = vmatprep.subr.mxu0 0.0
      %1564 = vmatpush2.msra.mxu0 %v1432
      %1565 = vmatprep.subr.mxu0 0.0
      %1566 = vmatpush2.msra.mxu0 %v1431
      %1567 = vmatprep.subr.mxu0 0.0
      %1568 = vmatpush2.msra.mxu0 %v1430
      %1569 = vmatprep.subr.mxu0 0.0
      %1570 = vmatpush2.msra.mxu0 %v1429
      %1571 = vmatprep.subr.mxu0 0.0
      %1572 = vmatpush2.msra.mxu0 %v1428
      %1573 = vmatprep.subr.mxu0 0.0
      %1574 = vmatpush2.msra.mxu0 %v1427
      %1575 = vmatprep.mubr.f32.mxu0 %v1379
      %1576 = vmatmul.mubr.f32.gmra.mxu0 %v1283
      %v1577 = vpop.f32.mrf.mxu0
      %v1578 = vadd.f32 0.0, %v1577
      %v1579 = vpop.f32.mrf.mxu0
      %1580 = vmatprep.mubr.f32.mxu0 %v1380
      %1581 = vmatmul.mubr.f32.gmra.mxu0 %v1284
      %v1582 = vpop.f32.mrf.mxu0
      %v1583 = vadd.f32 0.0, %v1582
      %v1584 = vpop.f32.mrf.mxu0
      %1585 = vmatprep.mubr.f32.mxu0 %v1381
      %1586 = vmatmul.mubr.f32.gmra.mxu0 %v1285
      %v1587 = vpop.f32.mrf.mxu0
      %v1588 = vadd.f32 0.0, %v1587
      %v1589 = vpop.f32.mrf.mxu0
      %1590 = vmatprep.mubr.f32.mxu0 %v1382
      %1591 = vmatmul.mubr.f32.gmra.mxu0 %v1286
      %v1592 = vpop.f32.mrf.mxu0
      %v1593 = vadd.f32 0.0, %v1592
      %v1594 = vpop.f32.mrf.mxu0
      %1595 = vmatprep.mubr.f32.mxu0 %v1383
      %1596 = vmatmul.mubr.f32.gmra.mxu0 %v1287
      %v1597 = vpop.f32.mrf.mxu0
      %v1598 = vadd.f32 0.0, %v1597
      %v1599 = vpop.f32.mrf.mxu0
      %1600 = vmatprep.mubr.f32.mxu0 %v1384
      %1601 = vmatmul.mubr.f32.gmra.mxu0 %v1288
      %v1602 = vpop.f32.mrf.mxu0
      %v1603 = vadd.f32 0.0, %v1602
      %v1604 = vpop.f32.mrf.mxu0
      %1605 = vmatprep.mubr.f32.mxu0 %v1385
      %1606 = vmatmul.mubr.f32.gmra.mxu0 %v1289
      %v1607 = vpop.f32.mrf.mxu0
      %v1608 = vadd.f32 0.0, %v1607
      %v1609 = vpop.f32.mrf.mxu0
      %1610 = vmatprep.mubr.f32.mxu0 %v1386
      %1611 = vmatmul.mubr.f32.gmra.mxu0 %v1290
      %v1612 = vpop.f32.mrf.mxu0
      %v1613 = vadd.f32 0.0, %v1612
      %v1614 = vpop.f32.mrf.mxu0
      %1615 = vmatprep.mubr.f32.mxu0 %v1387
      %1616 = vmatmul.mubr.f32.gmra.mxu0 %v1291
      %v1617 = vpop.f32.mrf.mxu0
      %v1618 = vadd.f32 0.0, %v1617
      %v1619 = vpop.f32.mrf.mxu0
      %1620 = vmatprep.mubr.f32.mxu0 %v1388
      %1621 = vmatmul.mubr.f32.gmra.mxu0 %v1292
      %v1622 = vpop.f32.mrf.mxu0
      %v1623 = vadd.f32 0.0, %v1622
      %v1624 = vpop.f32.mrf.mxu0
      %1625 = vmatprep.mubr.f32.mxu0 %v1389
      %1626 = vmatmul.mubr.f32.gmra.mxu0 %v1293
      %v1627 = vpop.f32.mrf.mxu0
      %v1628 = vadd.f32 0.0, %v1627
      %v1629 = vpop.f32.mrf.mxu0
      %1630 = vmatprep.mubr.f32.mxu0 %v1390
      %1631 = vmatmul.mubr.f32.gmra.mxu0 %v1294
      %v1632 = vpop.f32.mrf.mxu0
      %v1633 = vadd.f32 0.0, %v1632
      %v1634 = vpop.f32.mrf.mxu0
      %1635 = vmatprep.mubr.f32.mxu0 %v1391
      %1636 = vmatmul.mubr.f32.gmra.mxu0 %v1295
      %v1637 = vpop.f32.mrf.mxu0
      %v1638 = vadd.f32 0.0, %v1637
      %v1639 = vpop.f32.mrf.mxu0
      %1640 = vmatprep.mubr.f32.mxu0 %v1392
      %1641 = vmatmul.mubr.f32.gmra.mxu0 %v1296
      %v1642 = vpop.f32.mrf.mxu0
      %v1643 = vadd.f32 0.0, %v1642
      %v1644 = vpop.f32.mrf.mxu0
      %1645 = vmatprep.mubr.f32.mxu0 %v1393
      %1646 = vmatmul.mubr.f32.gmra.mxu0 %v1297
      %v1647 = vpop.f32.mrf.mxu0
      %v1648 = vadd.f32 0.0, %v1647
      %v1649 = vpop.f32.mrf.mxu0
      %1650 = vmatprep.mubr.f32.mxu0 %v1394
      %1651 = vmatmul.mubr.f32.gmra.mxu0 %v1298
      %v1652 = vpop.f32.mrf.mxu0
      %v1653 = vadd.f32 0.0, %v1652
      %v1654 = vpop.f32.mrf.mxu0
      %1655 = vmatprep.mubr.f32.mxu0 %v1395
      %1656 = vmatmul.mubr.f32.gmra.mxu0 %v1299
      %v1657 = vpop.f32.mrf.mxu0
      %v1658 = vadd.f32 0.0, %v1657
      %v1659 = vpop.f32.mrf.mxu0
      %1660 = vmatprep.mubr.f32.mxu0 %v1396
      %1661 = vmatmul.mubr.f32.gmra.mxu0 %v1300
      %v1662 = vpop.f32.mrf.mxu0
      %v1663 = vadd.f32 0.0, %v1662
      %v1664 = vpop.f32.mrf.mxu0
      %1665 = vmatprep.mubr.f32.mxu0 %v1397
      %1666 = vmatmul.mubr.f32.gmra.mxu0 %v1301
      %v1667 = vpop.f32.mrf.mxu0
      %v1668 = vadd.f32 0.0, %v1667
      %v1669 = vpop.f32.mrf.mxu0
      %1670 = vmatprep.mubr.f32.mxu0 %v1398
      %1671 = vmatmul.mubr.f32.gmra.mxu0 %v1302
      %v1672 = vpop.f32.mrf.mxu0
      %v1673 = vadd.f32 0.0, %v1672
      %v1674 = vpop.f32.mrf.mxu0
      %1675 = vmatprep.mubr.f32.mxu0 %v1399
      %1676 = vmatmul.mubr.f32.gmra.mxu0 %v1303
      %v1677 = vpop.f32.mrf.mxu0
      %v1678 = vadd.f32 0.0, %v1677
      %v1679 = vpop.f32.mrf.mxu0
      %1680 = vmatprep.mubr.f32.mxu0 %v1400
      %1681 = vmatmul.mubr.f32.gmra.mxu0 %v1304
      %v1682 = vpop.f32.mrf.mxu0
      %v1683 = vadd.f32 0.0, %v1682
      %v1684 = vpop.f32.mrf.mxu0
      %1685 = vmatprep.mubr.f32.mxu0 %v1401
      %1686 = vmatmul.mubr.f32.gmra.mxu0 %v1305
      %v1687 = vpop.f32.mrf.mxu0
      %v1688 = vadd.f32 0.0, %v1687
      %v1689 = vpop.f32.mrf.mxu0
      %1690 = vmatprep.mubr.f32.mxu0 %v1402
      %1691 = vmatmul.mubr.f32.gmra.mxu0 %v1306
      %v1692 = vpop.f32.mrf.mxu0
      %v1693 = vadd.f32 0.0, %v1692
      %v1694 = vpop.f32.mrf.mxu0
      %1695 = vmatprep.mubr.f32.mxu0 %v1403
      %1696 = vmatmul.mubr.f32.gmra.mxu0 %v1307
      %v1697 = vpop.f32.mrf.mxu0
      %v1698 = vadd.f32 0.0, %v1697
      %v1699 = vpop.f32.mrf.mxu0
      %1700 = vmatprep.mubr.f32.mxu0 %v1404
      %1701 = vmatmul.mubr.f32.gmra.mxu0 %v1308
      %v1702 = vpop.f32.mrf.mxu0
      %v1703 = vadd.f32 0.0, %v1702
      %v1704 = vpop.f32.mrf.mxu0
      %1705 = vmatprep.mubr.f32.mxu0 %v1405
      %1706 = vmatmul.mubr.f32.gmra.mxu0 %v1309
      %v1707 = vpop.f32.mrf.mxu0
      %v1708 = vadd.f32 0.0, %v1707
      %v1709 = vpop.f32.mrf.mxu0
      %1710 = vmatprep.mubr.f32.mxu0 %v1406
      %1711 = vmatmul.mubr.f32.gmra.mxu0 %v1310
      %v1712 = vpop.f32.mrf.mxu0
      %v1713 = vadd.f32 0.0, %v1712
      %v1714 = vpop.f32.mrf.mxu0
      %1715 = vmatprep.mubr.f32.mxu0 %v1407
      %1716 = vmatmul.mubr.f32.gmra.mxu0 %v1311
      %v1717 = vpop.f32.mrf.mxu0
      %v1718 = vadd.f32 0.0, %v1717
      %v1719 = vpop.f32.mrf.mxu0
      %1720 = vmatprep.mubr.f32.mxu0 %v1408
      %1721 = vmatmul.mubr.f32.gmra.mxu0 %v1312
      %v1722 = vpop.f32.mrf.mxu0
      %v1723 = vadd.f32 0.0, %v1722
      %v1724 = vpop.f32.mrf.mxu0
      %1725 = vmatprep.mubr.f32.mxu0 %v1409
      %1726 = vmatmul.mubr.f32.gmra.mxu0 %v1313
      %v1727 = vpop.f32.mrf.mxu0
      %v1728 = vadd.f32 0.0, %v1727
      %v1729 = vpop.f32.mrf.mxu0
      %1730 = vmatprep.mubr.f32.mxu0 %v1410
      %1731 = vmatmul.mubr.f32.gmra.mxu0 %v1314
      %v1732 = vpop.f32.mrf.mxu0
      %v1733 = vadd.f32 0.0, %v1732
      %v1734 = vpop.f32.mrf.mxu0
      %1735 = vdwg.mxu0
      %1736 = vmatprep.subr.mxu0 0.0
      %1737 = vmatpush1.msra.mxu0 0.0
      %1738 = vmatprep.subr.mxu0 0.0
      %1739 = vmatpush1.msra.mxu0 0.0
      %1740 = vmatprep.subr.mxu0 0.0
      %1741 = vmatpush1.msra.mxu0 0.0
      %1742 = vmatprep.subr.mxu0 0.0
      %1743 = vmatpush1.msra.mxu0 0.0
      %1744 = vmatprep.subr.mxu0 0.0
      %1745 = vmatpush1.msra.mxu0 0.0
      %1746 = vmatprep.subr.mxu0 0.0
      %1747 = vmatpush1.msra.mxu0 0.0
      %1748 = vmatprep.subr.mxu0 0.0
      %1749 = vmatpush1.msra.mxu0 0.0
      %1750 = vmatprep.subr.mxu0 0.0
      %1751 = vmatpush1.msra.mxu0 0.0
      %1752 = vmatprep.subr.mxu0 0.0
      %1753 = vmatpush1.msra.mxu0 0.0
      %1754 = vmatprep.subr.mxu0 0.0
      %1755 = vmatpush1.msra.mxu0 0.0
      %1756 = vmatprep.subr.mxu0 0.0
      %1757 = vmatpush1.msra.mxu0 0.0
      %1758 = vmatprep.subr.mxu0 0.0
      %1759 = vmatpush1.msra.mxu0 0.0
      %1760 = vmatprep.subr.mxu0 0.0
      %1761 = vmatpush1.msra.mxu0 %v1446
      %1762 = vmatprep.subr.mxu0 0.0
      %1763 = vmatpush1.msra.mxu0 %v1445
      %1764 = vmatprep.subr.mxu0 0.0
      %1765 = vmatpush1.msra.mxu0 %v1444
      %1766 = vmatprep.subr.mxu0 0.0
      %1767 = vmatpush1.msra.mxu0 %v1443
      %1768 = vmatprep.subr.mxu0 0.0
      %1769 = vmatpush2.msra.mxu0 0.0
      %1770 = vmatprep.subr.mxu0 0.0
      %1771 = vmatpush2.msra.mxu0 0.0
      %1772 = vmatprep.subr.mxu0 0.0
      %1773 = vmatpush2.msra.mxu0 0.0
      %1774 = vmatprep.subr.mxu0 0.0
      %1775 = vmatpush2.msra.mxu0 0.0
      %1776 = vmatprep.subr.mxu0 0.0
      %1777 = vmatpush2.msra.mxu0 0.0
      %1778 = vmatprep.subr.mxu0 0.0
      %1779 = vmatpush2.msra.mxu0 0.0
      %1780 = vmatprep.subr.mxu0 0.0
      %1781 = vmatpush2.msra.mxu0 0.0
      %1782 = vmatprep.subr.mxu0 0.0
      %1783 = vmatpush2.msra.mxu0 0.0
      %1784 = vmatprep.subr.mxu0 0.0
      %1785 = vmatpush2.msra.mxu0 0.0
      %1786 = vmatprep.subr.mxu0 0.0
      %1787 = vmatpush2.msra.mxu0 0.0
      %1788 = vmatprep.subr.mxu0 0.0
      %1789 = vmatpush2.msra.mxu0 0.0
      %1790 = vmatprep.subr.mxu0 0.0
      %1791 = vmatpush2.msra.mxu0 0.0
      %1792 = vmatprep.subr.mxu0 0.0
      %1793 = vmatpush2.msra.mxu0 0.0
      %1794 = vmatprep.subr.mxu0 0.0
      %1795 = vmatpush2.msra.mxu0 0.0
      %1796 = vmatprep.subr.mxu0 0.0
      %1797 = vmatpush2.msra.mxu0 0.0
      %1798 = vmatprep.subr.mxu0 0.0
      %1799 = vmatpush2.msra.mxu0 0.0
      %1800 = vmatprep.mubr.f32.mxu0 0.0
      %1801 = vmatmul.mubr.f32.gmra.mxu0 %v1447
      %v1802 = vpop.f32.mrf.mxu0
      %v1803 = vadd.f32 %v1578, %v1802
      %v1804 = vpop.f32.mrf.mxu0
      %1805 = vmatprep.mubr.f32.mxu0 0.0
      %1806 = vmatmul.mubr.f32.gmra.mxu0 %v1449
      %v1807 = vpop.f32.mrf.mxu0
      %v1808 = vadd.f32 %v1583, %v1807
      %v1809 = vpop.f32.mrf.mxu0
      %1810 = vmatprep.mubr.f32.mxu0 0.0
      %1811 = vmatmul.mubr.f32.gmra.mxu0 %v1451
      %v1812 = vpop.f32.mrf.mxu0
      %v1813 = vadd.f32 %v1588, %v1812
      %v1814 = vpop.f32.mrf.mxu0
      %1815 = vmatprep.mubr.f32.mxu0 0.0
      %1816 = vmatmul.mubr.f32.gmra.mxu0 %v1453
      %v1817 = vpop.f32.mrf.mxu0
      %v1818 = vadd.f32 %v1593, %v1817
      %v1819 = vpop.f32.mrf.mxu0
      %1820 = vmatprep.mubr.f32.mxu0 0.0
      %1821 = vmatmul.mubr.f32.gmra.mxu0 %v1455
      %v1822 = vpop.f32.mrf.mxu0
      %v1823 = vadd.f32 %v1598, %v1822
      %v1824 = vpop.f32.mrf.mxu0
      %1825 = vmatprep.mubr.f32.mxu0 0.0
      %1826 = vmatmul.mubr.f32.gmra.mxu0 %v1457
      %v1827 = vpop.f32.mrf.mxu0
      %v1828 = vadd.f32 %v1603, %v1827
      %v1829 = vpop.f32.mrf.mxu0
      %1830 = vmatprep.mubr.f32.mxu0 0.0
      %1831 = vmatmul.mubr.f32.gmra.mxu0 %v1459
      %v1832 = vpop.f32.mrf.mxu0
      %v1833 = vadd.f32 %v1608, %v1832
      %v1834 = vpop.f32.mrf.mxu0
      %1835 = vmatprep.mubr.f32.mxu0 0.0
      %1836 = vmatmul.mubr.f32.gmra.mxu0 %v1461
      %v1837 = vpop.f32.mrf.mxu0
      %v1838 = vadd.f32 %v1613, %v1837
      %v1839 = vpop.f32.mrf.mxu0
      %1840 = vmatprep.mubr.f32.mxu0 0.0
      %1841 = vmatmul.mubr.f32.gmra.mxu0 %v1463
      %v1842 = vpop.f32.mrf.mxu0
      %v1843 = vadd.f32 %v1618, %v1842
      %v1844 = vpop.f32.mrf.mxu0
      %1845 = vmatprep.mubr.f32.mxu0 0.0
      %1846 = vmatmul.mubr.f32.gmra.mxu0 %v1465
      %v1847 = vpop.f32.mrf.mxu0
      %v1848 = vadd.f32 %v1623, %v1847
      %v1849 = vpop.f32.mrf.mxu0
      %1850 = vmatprep.mubr.f32.mxu0 0.0
      %1851 = vmatmul.mubr.f32.gmra.mxu0 %v1467
      %v1852 = vpop.f32.mrf.mxu0
      %v1853 = vadd.f32 %v1628, %v1852
      %v1854 = vpop.f32.mrf.mxu0
      %1855 = vmatprep.mubr.f32.mxu0 0.0
      %1856 = vmatmul.mubr.f32.gmra.mxu0 %v1469
      %v1857 = vpop.f32.mrf.mxu0
      %v1858 = vadd.f32 %v1633, %v1857
      %v1859 = vpop.f32.mrf.mxu0
      %1860 = vmatprep.mubr.f32.mxu0 0.0
      %1861 = vmatmul.mubr.f32.gmra.mxu0 %v1471
      %v1862 = vpop.f32.mrf.mxu0
      %v1863 = vadd.f32 %v1638, %v1862
      %v1864 = vpop.f32.mrf.mxu0
      %1865 = vmatprep.mubr.f32.mxu0 0.0
      %1866 = vmatmul.mubr.f32.gmra.mxu0 %v1473
      %v1867 = vpop.f32.mrf.mxu0
      %v1868 = vadd.f32 %v1643, %v1867
      %v1869 = vpop.f32.mrf.mxu0
      %1870 = vmatprep.mubr.f32.mxu0 0.0
      %1871 = vmatmul.mubr.f32.gmra.mxu0 %v1475
      %v1872 = vpop.f32.mrf.mxu0
      %v1873 = vadd.f32 %v1648, %v1872
      %v1874 = vpop.f32.mrf.mxu0
      %1875 = vmatprep.mubr.f32.mxu0 0.0
      %1876 = vmatmul.mubr.f32.gmra.mxu0 %v1477
      %v1877 = vpop.f32.mrf.mxu0
      %v1878 = vadd.f32 %v1653, %v1877
      %v1879 = vpop.f32.mrf.mxu0
      %1880 = vmatprep.mubr.f32.mxu0 0.0
      %1881 = vmatmul.mubr.f32.gmra.mxu0 %v1479
      %v1882 = vpop.f32.mrf.mxu0
      %v1883 = vadd.f32 %v1658, %v1882
      %v1884 = vpop.f32.mrf.mxu0
      %1885 = vmatprep.mubr.f32.mxu0 0.0
      %1886 = vmatmul.mubr.f32.gmra.mxu0 %v1481
      %v1887 = vpop.f32.mrf.mxu0
      %v1888 = vadd.f32 %v1663, %v1887
      %v1889 = vpop.f32.mrf.mxu0
      %1890 = vmatprep.mubr.f32.mxu0 0.0
      %1891 = vmatmul.mubr.f32.gmra.mxu0 %v1483
      %v1892 = vpop.f32.mrf.mxu0
      %v1893 = vadd.f32 %v1668, %v1892
      %v1894 = vpop.f32.mrf.mxu0
      %1895 = vmatprep.mubr.f32.mxu0 0.0
      %1896 = vmatmul.mubr.f32.gmra.mxu0 %v1485
      %v1897 = vpop.f32.mrf.mxu0
      %v1898 = vadd.f32 %v1673, %v1897
      %v1899 = vpop.f32.mrf.mxu0
      %1900 = vmatprep.mubr.f32.mxu0 0.0
      %1901 = vmatmul.mubr.f32.gmra.mxu0 %v1487
      %v1902 = vpop.f32.mrf.mxu0
      %v1903 = vadd.f32 %v1678, %v1902
      %v1904 = vpop.f32.mrf.mxu0
      %1905 = vmatprep.mubr.f32.mxu0 0.0
      %1906 = vmatmul.mubr.f32.gmra.mxu0 %v1489
      %v1907 = vpop.f32.mrf.mxu0
      %v1908 = vadd.f32 %v1683, %v1907
      %v1909 = vpop.f32.mrf.mxu0
      %1910 = vmatprep.mubr.f32.mxu0 0.0
      %1911 = vmatmul.mubr.f32.gmra.mxu0 %v1491
      %v1912 = vpop.f32.mrf.mxu0
      %v1913 = vadd.f32 %v1688, %v1912
      %v1914 = vpop.f32.mrf.mxu0
      %1915 = vmatprep.mubr.f32.mxu0 0.0
      %1916 = vmatmul.mubr.f32.gmra.mxu0 %v1493
      %v1917 = vpop.f32.mrf.mxu0
      %v1918 = vadd.f32 %v1693, %v1917
      %v1919 = vpop.f32.mrf.mxu0
      %1920 = vmatprep.mubr.f32.mxu0 0.0
      %1921 = vmatmul.mubr.f32.gmra.mxu0 %v1495
      %v1922 = vpop.f32.mrf.mxu0
      %v1923 = vadd.f32 %v1698, %v1922
      %v1924 = vpop.f32.mrf.mxu0
      %1925 = vmatprep.mubr.f32.mxu0 0.0
      %1926 = vmatmul.mubr.f32.gmra.mxu0 %v1497
      %v1927 = vpop.f32.mrf.mxu0
      %v1928 = vadd.f32 %v1703, %v1927
      %v1929 = vpop.f32.mrf.mxu0
      %1930 = vmatprep.mubr.f32.mxu0 0.0
      %1931 = vmatmul.mubr.f32.gmra.mxu0 %v1499
      %v1932 = vpop.f32.mrf.mxu0
      %v1933 = vadd.f32 %v1708, %v1932
      %v1934 = vpop.f32.mrf.mxu0
      %1935 = vmatprep.mubr.f32.mxu0 0.0
      %1936 = vmatmul.mubr.f32.gmra.mxu0 %v1501
      %v1937 = vpop.f32.mrf.mxu0
      %v1938 = vadd.f32 %v1713, %v1937
      %v1939 = vpop.f32.mrf.mxu0
      %1940 = vmatprep.mubr.f32.mxu0 0.0
      %1941 = vmatmul.mubr.f32.gmra.mxu0 %v1503
      %v1942 = vpop.f32.mrf.mxu0
      %v1943 = vadd.f32 %v1718, %v1942
      %v1944 = vpop.f32.mrf.mxu0
      %1945 = vmatprep.mubr.f32.mxu0 0.0
      %1946 = vmatmul.mubr.f32.gmra.mxu0 %v1505
      %v1947 = vpop.f32.mrf.mxu0
      %v1948 = vadd.f32 %v1723, %v1947
      %v1949 = vpop.f32.mrf.mxu0
      %1950 = vmatprep.mubr.f32.mxu0 0.0
      %1951 = vmatmul.mubr.f32.gmra.mxu0 %v1507
      %v1952 = vpop.f32.mrf.mxu0
      %v1953 = vadd.f32 %v1728, %v1952
      %v1954 = vpop.f32.mrf.mxu0
      %1955 = vmatprep.mubr.f32.mxu0 0.0
      %1956 = vmatmul.mubr.f32.gmra.mxu0 %v1509
      %v1957 = vpop.f32.mrf.mxu0
      %v1958 = vadd.f32 %v1733, %v1957
      %v1959 = vpop.f32.mrf.mxu0
      %1960 = vdwg.mxu0
      %v1961 = vld [vmem:[%s2] sm:$0x1]
      %v1963 = vlaneseq
      %v1964 = vshrl.u32 %v1963, 7
      %v1965 = vsub.s32 0, %v1964
      %v1966 = vrot.slane %v1961, %v1965
      %v1968 = vmul.f32 %v1803, %v1966
      %v1969 = vmul.f32 %v1808, %v1966
      %v1970 = vmul.f32 %v1813, %v1966
      %v1971 = vmul.f32 %v1818, %v1966
      %v1972 = vmul.f32 %v1823, %v1966
      %v1973 = vmul.f32 %v1828, %v1966
      %v1974 = vmul.f32 %v1833, %v1966
      %v1975 = vmul.f32 %v1838, %v1966
      %v1976 = vmul.f32 %v1843, %v1966
      %v1977 = vmul.f32 %v1848, %v1966
      %v1978 = vmul.f32 %v1853, %v1966
      %v1979 = vmul.f32 %v1858, %v1966
      %v1980 = vmul.f32 %v1863, %v1966
      %v1981 = vmul.f32 %v1868, %v1966
      %v1982 = vmul.f32 %v1873, %v1966
      %v1983 = vmul.f32 %v1878, %v1966
      %v1984 = vmul.f32 %v1883, %v1966
      %v1985 = vmul.f32 %v1888, %v1966
      %v1986 = vmul.f32 %v1893, %v1966
      %v1987 = vmul.f32 %v1898, %v1966
      %v1988 = vmul.f32 %v1903, %v1966
      %v1989 = vmul.f32 %v1908, %v1966
      %v1990 = vmul.f32 %v1913, %v1966
      %v1991 = vmul.f32 %v1918, %v1966
      %v1992 = vmul.f32 %v1923, %v1966
      %v1993 = vmul.f32 %v1928, %v1966
      %v1994 = vmul.f32 %v1933, %v1966
      %v1995 = vmul.f32 %v1938, %v1966
      %v1996 = vmul.f32 %v1943, %v1966
      %v1997 = vmul.f32 %v1948, %v1966
      %v1998 = vmul.f32 %v1953, %v1966
      %v1999 = vmul.f32 %v1958, %v1966
      %v2000 = vld [vmem:[%s3] sm:$0x1]
      %v2002 = vlaneseq
      %v2003 = vshrl.u32 %v2002, 7
      %v2004 = vsub.s32 0, %v2003
      %v2005 = vrot.slane %v2000, %v2004
      %v2007 = vadd.f32 %v1968, %v2005
      %v2008 = vadd.f32 %v1969, %v2005
      %v2009 = vadd.f32 %v1970, %v2005
      %v2010 = vadd.f32 %v1971, %v2005
      %v2011 = vadd.f32 %v1972, %v2005
      %v2012 = vadd.f32 %v1973, %v2005
      %v2013 = vadd.f32 %v1974, %v2005
      %v2014 = vadd.f32 %v1975, %v2005
      %v2015 = vadd.f32 %v1976, %v2005
      %v2016 = vadd.f32 %v1977, %v2005
      %v2017 = vadd.f32 %v1978, %v2005
      %v2018 = vadd.f32 %v1979, %v2005
      %v2019 = vadd.f32 %v1980, %v2005
      %v2020 = vadd.f32 %v1981, %v2005
      %v2021 = vadd.f32 %v1982, %v2005
      %v2022 = vadd.f32 %v1983, %v2005
      %v2023 = vadd.f32 %v1984, %v2005
      %v2024 = vadd.f32 %v1985, %v2005
      %v2025 = vadd.f32 %v1986, %v2005
      %v2026 = vadd.f32 %v1987, %v2005
      %v2027 = vadd.f32 %v1988, %v2005
      %v2028 = vadd.f32 %v1989, %v2005
      %v2029 = vadd.f32 %v1990, %v2005
      %v2030 = vadd.f32 %v1991, %v2005
      %v2031 = vadd.f32 %v1992, %v2005
      %v2032 = vadd.f32 %v1993, %v2005
      %v2033 = vadd.f32 %v1994, %v2005
      %v2034 = vadd.f32 %v1995, %v2005
      %v2035 = vadd.f32 %v1996, %v2005
      %v2036 = vadd.f32 %v1997, %v2005
      %v2037 = vadd.f32 %v1998, %v2005
      %v2038 = vadd.f32 %v1999, %v2005
      %v2039 = vmax.f32 %v2007, 0.0
      %v2040 = vmax.f32 %v2008, 0.0
      %v2041 = vmax.f32 %v2009, 0.0
      %v2042 = vmax.f32 %v2010, 0.0
      %v2043 = vmax.f32 %v2011, 0.0
      %v2044 = vmax.f32 %v2012, 0.0
      %v2045 = vmax.f32 %v2013, 0.0
      %v2046 = vmax.f32 %v2014, 0.0
      %v2047 = vmax.f32 %v2015, 0.0
      %v2048 = vmax.f32 %v2016, 0.0
      %v2049 = vmax.f32 %v2017, 0.0
      %v2050 = vmax.f32 %v2018, 0.0
      %v2051 = vmax.f32 %v2019, 0.0
      %v2052 = vmax.f32 %v2020, 0.0
      %v2053 = vmax.f32 %v2021, 0.0
      %v2054 = vmax.f32 %v2022, 0.0
      %v2055 = vmax.f32 %v2023, 0.0
      %v2056 = vmax.f32 %v2024, 0.0
      %v2057 = vmax.f32 %v2025, 0.0
      %v2058 = vmax.f32 %v2026, 0.0
      %v2059 = vmax.f32 %v2027, 0.0
      %v2060 = vmax.f32 %v2028, 0.0
      %v2061 = vmax.f32 %v2029, 0.0
      %v2062 = vmax.f32 %v2030, 0.0
      %v2063 = vmax.f32 %v2031, 0.0
      %v2064 = vmax.f32 %v2032, 0.0
      %v2065 = vmax.f32 %v2033, 0.0
      %v2066 = vmax.f32 %v2034, 0.0
      %v2067 = vmax.f32 %v2035, 0.0
      %v2068 = vmax.f32 %v2036, 0.0
      %v2069 = vmax.f32 %v2037, 0.0
      %v2070 = vmax.f32 %v2038, 0.0
      %v2071 = vadd.f32 %v2039, %v198
      %v2072 = vadd.f32 %v2040, %v199
      %v2073 = vadd.f32 %v2041, %v200
      %v2074 = vadd.f32 %v2042, %v201
      %v2075 = vadd.f32 %v2043, %v202
      %v2076 = vadd.f32 %v2044, %v203
      %v2077 = vadd.f32 %v2045, %v204
      %v2078 = vadd.f32 %v2046, %v205
      %v2079 = vadd.f32 %v2047, %v206
      %v2080 = vadd.f32 %v2048, %v207
      %v2081 = vadd.f32 %v2049, %v208
      %v2082 = vadd.f32 %v2050, %v209
      %v2083 = vadd.f32 %v2051, %v210
      %v2084 = vadd.f32 %v2052, %v211
      %v2085 = vadd.f32 %v2053, %v212
      %v2086 = vadd.f32 %v2054, %v213
      %v2087 = vadd.f32 %v2055, %v214
      %v2088 = vadd.f32 %v2056, %v215
      %v2089 = vadd.f32 %v2057, %v216
      %v2090 = vadd.f32 %v2058, %v217
      %v2091 = vadd.f32 %v2059, %v218
      %v2092 = vadd.f32 %v2060, %v219
      %v2093 = vadd.f32 %v2061, %v220
      %v2094 = vadd.f32 %v2062, %v221
      %v2095 = vadd.f32 %v2063, %v222
      %v2096 = vadd.f32 %v2064, %v223
      %v2097 = vadd.f32 %v2065, %v224
      %v2098 = vadd.f32 %v2066, %v225
      %v2099 = vadd.f32 %v2067, %v226
      %v2100 = vadd.f32 %v2068, %v227
      %v2101 = vadd.f32 %v2069, %v228
      %v2102 = vadd.f32 %v2070, %v229
      %2103 = vst.msk [vmem:[%s197] sm:$0xff] %vm230, %v2071
      %2104 = vst.msk [vmem:[%s197 + $0x8] sm:$0xff] %vm230, %v2072
      %2105 = vst.msk [vmem:[%s197 + $0x10] sm:$0xff] %vm230, %v2073
      %2106 = vst.msk [vmem:[%s197 + $0x18] sm:$0xff] %vm230, %v2074
      %2107 = vst.msk [vmem:[%s197 + $0x20] sm:$0xff] %vm230, %v2075
      %2108 = vst.msk [vmem:[%s197 + $0x28] sm:$0xff] %vm230, %v2076
      %2109 = vst.msk [vmem:[%s197 + $0x30] sm:$0xff] %vm230, %v2077
      %2110 = vst.msk [vmem:[%s197 + $0x38] sm:$0xff] %vm230, %v2078
      %2111 = vst.msk [vmem:[%s197 + $0x40] sm:$0xff] %vm230, %v2079
      %2112 = vst.msk [vmem:[%s197 + $0x48] sm:$0xff] %vm230, %v2080
      %2113 = vst.msk [vmem:[%s197 + $0x50] sm:$0xff] %vm230, %v2081
      %2114 = vst.msk [vmem:[%s197 + $0x58] sm:$0xff] %vm230, %v2082
      %2115 = vst.msk [vmem:[%s197 + $0x60] sm:$0xff] %vm230, %v2083
      %2116 = vst.msk [vmem:[%s197 + $0x68] sm:$0xff] %vm230, %v2084
      %2117 = vst.msk [vmem:[%s197 + $0x70] sm:$0xff] %vm230, %v2085
      %2118 = vst.msk [vmem:[%s197 + $0x78] sm:$0xff] %vm230, %v2086
      %2119 = vst.msk [vmem:[%s197 + $0x80] sm:$0xff] %vm230, %v2087
      %2120 = vst.msk [vmem:[%s197 + $0x88] sm:$0xff] %vm230, %v2088
      %2121 = vst.msk [vmem:[%s197 + $0x90] sm:$0xff] %vm230, %v2089
      %2122 = vst.msk [vmem:[%s197 + $0x98] sm:$0xff] %vm230, %v2090
      %2123 = vst.msk [vmem:[%s197 + $0xa0] sm:$0xff] %vm230, %v2091
      %2124 = vst.msk [vmem:[%s197 + $0xa8] sm:$0xff] %vm230, %v2092
      %2125 = vst.msk [vmem:[%s197 + $0xb0] sm:$0xff] %vm230, %v2093
      %2126 = vst.msk [vmem:[%s197 + $0xb8] sm:$0xff] %vm230, %v2094
      %2127 = vst.msk [vmem:[%s197 + $0xc0] sm:$0xff] %vm230, %v2095
      %2128 = vst.msk [vmem:[%s197 + $0xc8] sm:$0xff] %vm230, %v2096
      %2129 = vst.msk [vmem:[%s197 + $0xd0] sm:$0xff] %vm230, %v2097
      %2130 = vst.msk [vmem:[%s197 + $0xd8] sm:$0xff] %vm230, %v2098
      %2131 = vst.msk [vmem:[%s197 + $0xe0] sm:$0xff] %vm230, %v2099
      %2132 = vst.msk [vmem:[%s197 + $0xe8] sm:$0xff] %vm230, %v2100
      %2133 = vst.msk [vmem:[%s197 + $0xf0] sm:$0xff] %vm230, %v2101
      %2134 = vst.msk [vmem:[%s197 + $0xf8] sm:$0xff] %vm230, %v2102
      %p2135 = scmp.lt.s32.totalorder %s15, 1
      %s2136 = scalar_select %p2135, %s15, 1
      %s2137 = smul.addr %s2136, 32
      %s2138 = smul.addr %s2137, 8
      %s2139 = scalar_lea.vmem %s4, %s2138
      // Predicated region
      $region37: #{tpu_custom_call.1} parent=35 // pred_check
        %p2140 = pneg %p122
      $region38: #{tpu_custom_call.1} parent=35 // pred_check_branch
        %2142 = sbr.rel (%p2140) target = $region40
      $region39: #{tpu_custom_call.1} parent=35 // pred_region
        _
      $region40: #{tpu_custom_call.1} parent=35 // pred_fallthru
        _
    $region36: #{tpu_custom_call.1} parent=5 // pred_fallthru
      _
    %p2143 = scmp.le.s32.totalorder 2, %s10
    // Predicated region
    $region41: #{tpu_custom_call.1} parent=5 // pred_check
      %p2144 = pneg %p2143
    $region42: #{tpu_custom_call.1} parent=5 // pred_check_branch
      %2146 = sbr.rel (%p2144) target = $region44
    $region43: #{tpu_custom_call.1} parent=5 // pred_region
      %s2147 = ssub.s32 %s10, 2
      // Predicated region
      $region45: #{tpu_custom_call.1} parent=43 // pred_check
        %p2148 = pneg %p128
      $region46: #{tpu_custom_call.1} parent=43 // pred_check_branch
        %2150 = sbr.rel (%p2148) target = $region48
      $region47: #{tpu_custom_call.1} parent=43 // pred_region
        %p2151 = scmp.lt.s32.totalorder %s16, 1
        %s2152 = scalar_select %p2151, %s16, 1
        %s2153 = smul.addr %s2152, 32
        %s2154 = smul.addr %s2153, 8
        %s2155 = scalar_lea.vmem %s4, %s2154
      $region48: #{tpu_custom_call.1} parent=43 // pred_fallthru
        _
    $region44: #{tpu_custom_call.1} parent=5 // pred_fallthru
      _
  $region6: #{tpu_custom_call.1} parent=0 // loop_footer
    %s14 = sadd.s32 1, %s10
  $region7: #{tpu_custom_call.1} parent=0 // loop_footer_branch
    %9 = sbr.rel target = $region3
  $region8: #{tpu_custom_call.1} parent=0 // loop_exit
    _

</llo_original>
